<compile_context>
chip_gen: v6e
topology: v6e:2x2x1
jax: 0.10.0
libtpu: 0.0.40
codegen_flags: <defaults>
</compile_context>

<pallas_src>
import math
import jax
import jax.numpy as jnp
from jax.experimental import pallas as pl
from jax.experimental.pallas import tpu as pltpu

text = 'twinkle, twinkle, little star, how I wonder what you are'
chars = sorted(set(text))
INPUT_SIZE = len(chars)      # 18
OUTPUT_SIZE = len(chars)     # 18
HIDDEN_SIZE = 128


def _char_lstm_kernel(x_ref, h0_ref, c0_ref,
                      wih_ref, whh_ref, bias_ref,
                      wfc_ref, bfc_ref,
                      out_ref, hn_ref, cn_ref,
                      xp_scr, hs_scr):
    Bp, H = h0_ref.shape
    T = x_ref.shape[0] // Bp

    # (1) Hoisted input projection: one bf16 (T*Bp, Ip) @ (Ip, 4H) MXU pass with
    #     the combined bias folded in; f32 accumulation / storage.
    xp_scr[...] = (
        jnp.dot(x_ref[...], wih_ref[...], preferred_element_type=jnp.float32)
        + bias_ref[...])

    # (2) Serial LSTM recurrence, fully unrolled. Only h @ W_hh^T per step.
    #     W_hh^T is loop-invariant: read once (bf16) so Mosaic can keep it
    #     weight-stationary across the unrolled steps.
    whh_bf16 = whh_ref[...]                        # (H, 4H) bf16, hoisted

    def step(t, carry):
        h, c = carry                               # f32 (Bp, H) each
        row = pl.multiple_of(t * Bp, Bp)           # 8-row aligned slice start
        gates = xp_scr[pl.ds(row, Bp), :] + jnp.dot(
            h.astype(jnp.bfloat16), whh_bf16,
            preferred_element_type=jnp.float32)    # (Bp, 4H) f32

        # PyTorch gate order: input, forget, cell(g), output.  Gate math in f32
        # (v5e VPU/EUP have no bf16; f32 keeps the tolerance tight).
        i_g = jax.nn.sigmoid(gates[:, 0 * H:1 * H])
        f_g = jax.nn.sigmoid(gates[:, 1 * H:2 * H])
        g_g = jnp.tanh(gates[:, 2 * H:3 * H])
        o_g = jax.nn.sigmoid(gates[:, 3 * H:4 * H])

        c_new = f_g * c + i_g * g_g
        h_new = o_g * jnp.tanh(c_new)

        hs_scr[pl.ds(row, Bp), :] = h_new          # lane-dense (Bp, 128) store
        return (h_new, c_new)

    h_fin, c_fin = jax.lax.fori_loop(
        0, T, step, (h0_ref[...], c0_ref[...]), unroll=True)

    hn_ref[...] = h_fin
    cn_ref[...] = c_fin

    # (3) Fused fc epilogue: ONE lane-dense bf16 (T*Bp, H) @ (H, Op) matmul over
    #     all timesteps (f32 accumulation) instead of T masked 18-lane stores.
    out_ref[...] = (
        jnp.dot(hs_scr[...].astype(jnp.bfloat16), wfc_ref[...],
                preferred_element_type=jnp.float32)
        + bfc_ref[...])


def char_lstm_forward(x, hidden, params):
    """x: (B, T, I) f32, hidden: (h0, c0) each (1, B, H). Returns (out, (h_n, c_n))."""
    W_ih, W_hh, b_ih, b_hh, W_fc, b_fc = params
    h0, c0 = hidden
    B, T, I = x.shape
    H = W_hh.shape[1]
    O = W_fc.shape[0]

    Bp = max(8, ((B + 7) // 8) * 8)             # pad batch to full sublane group
    Ip = max(32, ((I + 31) // 32) * 32)         # pad input features (18 -> 32)
    Op = max(128, ((O + 127) // 128) * 128)     # pad fc output to full lane group

    # Time-major, batch- and feature-padded, flattened rows ordered (t, b). bf16.
    x_tbi = jnp.transpose(x, (1, 0, 2)).astype(jnp.float32)            # (T, B, I)
    x_pad = jnp.zeros((T, Bp, Ip), jnp.float32).at[:, :B, :I].set(x_tbi)
    x_flat = x_pad.reshape(T * Bp, Ip).astype(jnp.bfloat16)            # (T*Bp, Ip)

    h0_p = jnp.zeros((Bp, H), jnp.float32).at[:B, :].set(h0.reshape(B, H).astype(jnp.float32))
    c0_p = jnp.zeros((Bp, H), jnp.float32).at[:B, :].set(c0.reshape(B, H).astype(jnp.float32))

    # Weights as bf16 MXU operands; biases stay f32 (added into f32 accumulators).
    wih_t = (jnp.zeros((Ip, 4 * H), jnp.float32)
             .at[:I, :].set(W_ih.T.astype(jnp.float32))).astype(jnp.bfloat16)   # (Ip, 4H)
    whh_t = W_hh.T.astype(jnp.bfloat16)                                         # (H, 4H)
    bias = (b_ih + b_hh).reshape(1, 4 * H).astype(jnp.float32)                  # pre-added

    wfc_t = (jnp.zeros((H, Op), jnp.float32)
             .at[:, :O].set(W_fc.T.astype(jnp.float32))).astype(jnp.bfloat16)   # (H, Op)
    bfc_p = jnp.zeros((1, Op), jnp.float32).at[:, :O].set(b_fc.reshape(1, O).astype(jnp.float32))

    grid_spec = pltpu.PrefetchScalarGridSpec(
        num_scalar_prefetch=0,
        grid=(1,),                                   # single invocation, all-resident
        in_specs=[
            pl.BlockSpec((T * Bp, Ip), lambda i: (0, 0)),     # x (time-major, flat, bf16)
            pl.BlockSpec((Bp, H), lambda i: (0, 0)),          # h0 (f32)
            pl.BlockSpec((Bp, H), lambda i: (0, 0)),          # c0 (f32)
            pl.BlockSpec((Ip, 4 * H), lambda i: (0, 0)),      # W_ih^T (bf16, padded K)
            pl.BlockSpec((H, 4 * H), lambda i: (0, 0)),       # W_hh^T (bf16)
            pl.BlockSpec((1, 4 * H), lambda i: (0, 0)),       # b_ih + b_hh (f32)
            pl.BlockSpec((H, Op), lambda i: (0, 0)),          # W_fc^T (bf16, padded N)
            pl.BlockSpec((1, Op), lambda i: (0, 0)),          # b_fc (f32, padded)
        ],
        out_specs=[
            pl.BlockSpec((T * Bp, Op), lambda i: (0, 0)),     # fc output, lane-dense f32
            pl.BlockSpec((Bp, H), lambda i: (0, 0)),          # h_n
            pl.BlockSpec((Bp, H), lambda i: (0, 0)),          # c_n
        ],
        scratch_shapes=[
            pltpu.VMEM((T * Bp, 4 * H), jnp.float32),         # hoisted x projection (f32)
            pltpu.VMEM((T * Bp, H), jnp.float32),             # collected hidden states (f32)
        ],
    )

    out_flat, h_n, c_n = pl.pallas_call(
        _char_lstm_kernel,
        grid_spec=grid_spec,
        out_shape=[
            jax.ShapeDtypeStruct((T * Bp, Op), jnp.float32),
            jax.ShapeDtypeStruct((Bp, H), jnp.float32),
            jax.ShapeDtypeStruct((Bp, H), jnp.float32),
        ],
        compiler_params=pltpu.CompilerParams(
            dimension_semantics=("arbitrary",)),
    )(x_flat, h0_p, c0_p, wih_t, whh_t, bias, wfc_t, bfc_p)

    # Un-pad and reorder to PyTorch layout: out.reshape(-1, H) from (B, T, H)
    # means row index = b*T + t.  Padded batch rows of h_n/c_n contain junk and
    # MUST be sliced off (done here with [:B]).
    out = out_flat.reshape(T, Bp, Op)[:, :B, :O]                 # (T, B, O)
    out = jnp.transpose(out, (1, 0, 2)).reshape(B * T, O)
    return out, (h_n[:B].reshape(1, B, H), c_n[:B].reshape(1, B, H))


def _ref_forward(x, hidden, params):
    """Pure-JAX f32 reference matching nn.LSTM(batch_first=True) + nn.Linear."""
    W_ih, W_hh, b_ih, b_hh, W_fc, b_fc = params
    h0, c0 = hidden
    B, T, I = x.shape
    H = W_hh.shape[1]

    def step(carry, x_t):
        h, c = carry
        gates = x_t @ W_ih.T + b_ih + h @ W_hh.T + b_hh
        i, f, g, o = jnp.split(gates, 4, axis=-1)
        i, f, g, o = jax.nn.sigmoid(i), jax.nn.sigmoid(f), jnp.tanh(g), jax.nn.sigmoid(o)
        c = f * c + i * g
        h = o * jnp.tanh(c)
        return (h, c), h

    (hT, cT), hs = jax.lax.scan(step, (h0.reshape(B, H), c0.reshape(B, H)),
                                jnp.transpose(x, (1, 0, 2)))
    out = jnp.transpose(hs, (1, 0, 2)).reshape(-1, H) @ W_fc.T + b_fc
    return out, (hT.reshape(1, B, H), cT.reshape(1, B, H))


def init_params(key, input_size, hidden_size, output_size):
    ks = jax.random.split(key, 6)
    k_lstm = 1.0 / math.sqrt(hidden_size)
    k_fc = 1.0 / math.sqrt(hidden_size)
    W_ih = jax.random.uniform(ks[0], (4 * hidden_size, input_size), jnp.float32, -k_lstm, k_lstm)
    W_hh = jax.random.uniform(ks[1], (4 * hidden_size, hidden_size), jnp.float32, -k_lstm, k_lstm)
    b_ih = jax.random.uniform(ks[2], (4 * hidden_size,), jnp.float32, -k_lstm, k_lstm)
    b_hh = jax.random.uniform(ks[3], (4 * hidden_size,), jnp.float32, -k_lstm, k_lstm)
    W_fc = jax.random.uniform(ks[4], (output_size, hidden_size), jnp.float32, -k_fc, k_fc)
    b_fc = jax.random.uniform(ks[5], (output_size,), jnp.float32, -k_fc, k_fc)
    return (W_ih, W_hh, b_ih, b_hh, W_fc, b_fc)


if __name__ == "__main__":
    key = jax.random.PRNGKey(0)
    k_param, k_x = jax.random.split(key)

    B, T = 2, 8
    params = init_params(k_param, INPUT_SIZE, HIDDEN_SIZE, OUTPUT_SIZE)

    x = jax.random.uniform(k_x, (B, T, INPUT_SIZE), jnp.float32)
    hidden = (jnp.zeros((1, B, HIDDEN_SIZE), jnp.float32),
              jnp.zeros((1, B, HIDDEN_SIZE), jnp.float32))   # init_hidden(batch_size)

    out, (h_n, c_n) = char_lstm_forward(x, hidden, params)
    jax.block_until_ready((out, h_n, c_n))

    out_ref, (h_ref, c_ref) = _ref_forward(x, hidden, params)
    assert out.shape == (B * T, OUTPUT_SIZE)
    assert h_n.shape == (1, B, HIDDEN_SIZE) and c_n.shape == (1, B, HIDDEN_SIZE)
    # Tolerance accounts for bf16 MXU operands (f32 accumulation / gate math /
    # cell state); expected drift vs the all-f32 reference is ~1e-3.
    assert jnp.allclose(out, out_ref, atol=1e-2, rtol=1e-2)
    assert jnp.allclose(h_n, h_ref, atol=1e-2, rtol=1e-2)
    assert jnp.allclose(c_n, c_ref, atol=1e-2, rtol=1e-2)

    print("KERNEL_OK")
</pallas_src>

<mosaic_0001>
module attributes {stable_mosaic.version = 11 : i64} {
  func.func @_char_lstm_kernel(%arg0: i32, %arg1: memref<64x32xbf16, #tpu.memory_space<vmem>>, %arg2: memref<8x128xf32, #tpu.memory_space<vmem>>, %arg3: memref<8x128xf32, #tpu.memory_space<vmem>>, %arg4: memref<32x512xbf16, #tpu.memory_space<vmem>>, %arg5: memref<128x512xbf16, #tpu.memory_space<vmem>>, %arg6: memref<1x512xf32, #tpu.memory_space<vmem>>, %arg7: memref<128x128xbf16, #tpu.memory_space<vmem>>, %arg8: memref<1x128xf32, #tpu.memory_space<vmem>>, %arg9: memref<64x128xf32, #tpu.memory_space<vmem>>, %arg10: memref<8x128xf32, #tpu.memory_space<vmem>>, %arg11: memref<8x128xf32, #tpu.memory_space<vmem>>, %arg12: memref<64x512xf32, #tpu.memory_space<vmem>>, %arg13: memref<64x128xf32, #tpu.memory_space<vmem>>) attributes {dimension_semantics = [#tpu.dimension_semantics<arbitrary>], iteration_bounds = array<i64: 1>, scalar_prefetch = 0 : i64, scratch_operands = 2 : i64, tpu.core_type = #tpu.core_type<tc>, window_params = [{pipeline_mode = #tpu.pipeline_mode<synchronous>, transform_indices = @transform_0, window_bounds = array<i64: 64, 32>}, {pipeline_mode = #tpu.pipeline_mode<synchronous>, transform_indices = @transform_1, window_bounds = array<i64: 8, 128>}, {pipeline_mode = #tpu.pipeline_mode<synchronous>, transform_indices = @transform_2, window_bounds = array<i64: 8, 128>}, {pipeline_mode = #tpu.pipeline_mode<synchronous>, transform_indices = @transform_3, window_bounds = array<i64: 32, 512>}, {pipeline_mode = #tpu.pipeline_mode<synchronous>, transform_indices = @transform_4, window_bounds = array<i64: 128, 512>}, {pipeline_mode = #tpu.pipeline_mode<synchronous>, transform_indices = @transform_5, window_bounds = array<i64: 1, 512>}, {pipeline_mode = #tpu.pipeline_mode<synchronous>, transform_indices = @transform_6, window_bounds = array<i64: 128, 128>}, {pipeline_mode = #tpu.pipeline_mode<synchronous>, transform_indices = @transform_7, window_bounds = array<i64: 1, 128>}, {pipeline_mode = #tpu.pipeline_mode<synchronous>, transform_indices = @transform_8, window_bounds = array<i64: 64, 128>}, {pipeline_mode = #tpu.pipeline_mode<synchronous>, transform_indices = @transform_9, window_bounds = array<i64: 8, 128>}, {pipeline_mode = #tpu.pipeline_mode<synchronous>, transform_indices = @transform_10, window_bounds = array<i64: 8, 128>}]} {
    %c0 = arith.constant 0 : index
    %c0_0 = arith.constant 0 : index
    %0 = vector.load %arg1[%c0, %c0_0] : memref<64x32xbf16, #tpu.memory_space<vmem>>, vector<64x32xbf16>
    %c0_1 = arith.constant 0 : index
    %c0_2 = arith.constant 0 : index
    %1 = vector.load %arg4[%c0_1, %c0_2] : memref<32x512xbf16, #tpu.memory_space<vmem>>, vector<32x512xbf16>
    %cst = arith.constant dense<0.000000e+00> : vector<64x512xf32>
    %2 = tpu.matmul %0, %1, %cst {dimension_numbers = #tpu.dot_dimension_numbers<[1], [0], [0], [1], [0, 0, 1, 1], [], []>} : vector<64x32xbf16>, vector<32x512xbf16>, vector<64x512xf32> -> vector<64x512xf32>
    %c0_3 = arith.constant 0 : index
    %c0_4 = arith.constant 0 : index
    %3 = vector.load %arg6[%c0_3, %c0_4] : memref<1x512xf32, #tpu.memory_space<vmem>>, vector<1x512xf32>
    %4 = vector.broadcast %3 : vector<1x512xf32> to vector<64x512xf32>
    %5 = arith.addf %2, %4 : vector<64x512xf32>
    %c0_5 = arith.constant 0 : index
    %c0_6 = arith.constant 0 : index
    %6 = vector.load %arg12[%c0_5, %c0_6] : memref<64x512xf32, #tpu.memory_space<vmem>>, vector<64x512xf32>
    tpu.vector_store %arg12[%c0_5, %c0_6], %5 {strides = array<i32>} : memref<64x512xf32, #tpu.memory_space<vmem>>, vector<64x512xf32>,
    %c0_7 = arith.constant 0 : index
    %c0_8 = arith.constant 0 : index
    %7 = vector.load %arg5[%c0_7, %c0_8] : memref<128x512xbf16, #tpu.memory_space<vmem>>, vector<128x512xbf16>
    %c0_9 = arith.constant 0 : index
    %c0_10 = arith.constant 0 : index
    %8 = vector.load %arg2[%c0_9, %c0_10] : memref<8x128xf32, #tpu.memory_space<vmem>>, vector<8x128xf32>
    %c0_11 = arith.constant 0 : index
    %c0_12 = arith.constant 0 : index
    %9 = vector.load %arg3[%c0_11, %c0_12] : memref<8x128xf32, #tpu.memory_space<vmem>>, vector<8x128xf32>
    %c0_i32 = arith.constant 0 : i32
    %c8_i32 = arith.constant 8 : i32
    %10 = arith.muli %c0_i32, %c8_i32 : i32
    %11 = tpu.assume_multiple %10, 8 : i32
    %12 = arith.index_cast %11 : i32 to index
    %c0_13 = arith.constant 0 : index
    %13 = vector.load %arg12[%12, %c0_13] : memref<64x512xf32, #tpu.memory_space<vmem>>, vector<8x512xf32>
    %14 = arith.truncf %8 : vector<8x128xf32> to vector<8x128xbf16>
    %cst_14 = arith.constant dense<0.000000e+00> : vector<8x512xf32>
    %15 = tpu.matmul %14, %7, %cst_14 {dimension_numbers = #tpu.dot_dimension_numbers<[1], [0], [0], [1], [0, 0, 1, 1], [], []>} : vector<8x128xbf16>, vector<128x512xbf16>, vector<8x512xf32> -> vector<8x512xf32>
    %16 = arith.addf %13, %15 : vector<8x512xf32>
    %17 = vector.extract_strided_slice %16 {offsets = [0, 0], sizes = [8, 128], strides = [1, 1]} : vector<8x512xf32> to vector<8x128xf32>
    %18 = arith.negf %17 : vector<8x128xf32>
    %19 = math.exp %18 : vector<8x128xf32>
    %cst_15 = arith.constant 1.000000e+00 : f32
    %20 = vector.broadcast %cst_15 : f32 to vector<8x128xf32>
    %21 = arith.addf %20, %19 : vector<8x128xf32>
    %22 = arith.divf %20, %21 : vector<8x128xf32>
    %23 = vector.extract_strided_slice %16 {offsets = [0, 128], sizes = [8, 128], strides = [1, 1]} : vector<8x512xf32> to vector<8x128xf32>
    %24 = arith.negf %23 : vector<8x128xf32>
    %25 = math.exp %24 : vector<8x128xf32>
    %cst_16 = arith.constant 1.000000e+00 : f32
    %26 = vector.broadcast %cst_16 : f32 to vector<8x128xf32>
    %27 = arith.addf %26, %25 : vector<8x128xf32>
    %28 = arith.divf %26, %27 : vector<8x128xf32>
    %29 = vector.extract_strided_slice %16 {offsets = [0, 256], sizes = [8, 128], strides = [1, 1]} : vector<8x512xf32> to vector<8x128xf32>
    %30 = math.tanh %29 : vector<8x128xf32>
    %31 = vector.extract_strided_slice %16 {offsets = [0, 384], sizes = [8, 128], strides = [1, 1]} : vector<8x512xf32> to vector<8x128xf32>
    %32 = arith.negf %31 : vector<8x128xf32>
    %33 = math.exp %32 : vector<8x128xf32>
    %cst_17 = arith.constant 1.000000e+00 : f32
    %34 = vector.broadcast %cst_17 : f32 to vector<8x128xf32>
    %35 = arith.addf %34, %33 : vector<8x128xf32>
    %36 = arith.divf %34, %35 : vector<8x128xf32>
    %37 = arith.mulf %28, %9 : vector<8x128xf32>
    %38 = arith.mulf %22, %30 : vector<8x128xf32>
    %39 = arith.addf %37, %38 : vector<8x128xf32>
    %40 = math.tanh %39 : vector<8x128xf32>
    %41 = arith.mulf %36, %40 : vector<8x128xf32>
    %42 = arith.index_cast %11 : i32 to index
    %c0_18 = arith.constant 0 : index
    %43 = vector.load %arg13[%42, %c0_18] : memref<64x128xf32, #tpu.memory_space<vmem>>, vector<8x128xf32>
    tpu.vector_store %arg13[%42, %c0_18], %41 {strides = array<i32>} : memref<64x128xf32, #tpu.memory_space<vmem>>, vector<8x128xf32>,
    %c1_i32 = arith.constant 1 : i32
    %c8_i32_19 = arith.constant 8 : i32
    %44 = arith.muli %c1_i32, %c8_i32_19 : i32
    %45 = tpu.assume_multiple %44, 8 : i32
    %46 = arith.index_cast %45 : i32 to index
    %c0_20 = arith.constant 0 : index
    %47 = vector.load %arg12[%46, %c0_20] : memref<64x512xf32, #tpu.memory_space<vmem>>, vector<8x512xf32>
    %48 = arith.truncf %41 : vector<8x128xf32> to vector<8x128xbf16>
    %cst_21 = arith.constant dense<0.000000e+00> : vector<8x512xf32>
    %49 = tpu.matmul %48, %7, %cst_21 {dimension_numbers = #tpu.dot_dimension_numbers<[1], [0], [0], [1], [0, 0, 1, 1], [], []>} : vector<8x128xbf16>, vector<128x512xbf16>, vector<8x512xf32> -> vector<8x512xf32>
    %50 = arith.addf %47, %49 : vector<8x512xf32>
    %51 = vector.extract_strided_slice %50 {offsets = [0, 0], sizes = [8, 128], strides = [1, 1]} : vector<8x512xf32> to vector<8x128xf32>
    %52 = arith.negf %51 : vector<8x128xf32>
    %53 = math.exp %52 : vector<8x128xf32>
    %cst_22 = arith.constant 1.000000e+00 : f32
    %54 = vector.broadcast %cst_22 : f32 to vector<8x128xf32>
    %55 = arith.addf %54, %53 : vector<8x128xf32>
    %56 = arith.divf %54, %55 : vector<8x128xf32>
    %57 = vector.extract_strided_slice %50 {offsets = [0, 128], sizes = [8, 128], strides = [1, 1]} : vector<8x512xf32> to vector<8x128xf32>
    %58 = arith.negf %57 : vector<8x128xf32>
    %59 = math.exp %58 : vector<8x128xf32>
    %cst_23 = arith.constant 1.000000e+00 : f32
    %60 = vector.broadcast %cst_23 : f32 to vector<8x128xf32>
    %61 = arith.addf %60, %59 : vector<8x128xf32>
    %62 = arith.divf %60, %61 : vector<8x128xf32>
    %63 = vector.extract_strided_slice %50 {offsets = [0, 256], sizes = [8, 128], strides = [1, 1]} : vector<8x512xf32> to vector<8x128xf32>
    %64 = math.tanh %63 : vector<8x128xf32>
    %65 = vector.extract_strided_slice %50 {offsets = [0, 384], sizes = [8, 128], strides = [1, 1]} : vector<8x512xf32> to vector<8x128xf32>
    %66 = arith.negf %65 : vector<8x128xf32>
    %67 = math.exp %66 : vector<8x128xf32>
    %cst_24 = arith.constant 1.000000e+00 : f32
    %68 = vector.broadcast %cst_24 : f32 to vector<8x128xf32>
    %69 = arith.addf %68, %67 : vector<8x128xf32>
    %70 = arith.divf %68, %69 : vector<8x128xf32>
    %71 = arith.mulf %62, %39 : vector<8x128xf32>
    %72 = arith.mulf %56, %64 : vector<8x128xf32>
    %73 = arith.addf %71, %72 : vector<8x128xf32>
    %74 = math.tanh %73 : vector<8x128xf32>
    %75 = arith.mulf %70, %74 : vector<8x128xf32>
    %76 = arith.index_cast %45 : i32 to index
    %c0_25 = arith.constant 0 : index
    %77 = vector.load %arg13[%76, %c0_25] : memref<64x128xf32, #tpu.memory_space<vmem>>, vector<8x128xf32>
    tpu.vector_store %arg13[%76, %c0_25], %75 {strides = array<i32>} : memref<64x128xf32, #tpu.memory_space<vmem>>, vector<8x128xf32>,
    %c2_i32 = arith.constant 2 : i32
    %c8_i32_26 = arith.constant 8 : i32
    %78 = arith.muli %c2_i32, %c8_i32_26 : i32
    %79 = tpu.assume_multiple %78, 8 : i32
    %80 = arith.index_cast %79 : i32 to index
    %c0_27 = arith.constant 0 : index
    %81 = vector.load %arg12[%80, %c0_27] : memref<64x512xf32, #tpu.memory_space<vmem>>, vector<8x512xf32>
    %82 = arith.truncf %75 : vector<8x128xf32> to vector<8x128xbf16>
    %cst_28 = arith.constant dense<0.000000e+00> : vector<8x512xf32>
    %83 = tpu.matmul %82, %7, %cst_28 {dimension_numbers = #tpu.dot_dimension_numbers<[1], [0], [0], [1], [0, 0, 1, 1], [], []>} : vector<8x128xbf16>, vector<128x512xbf16>, vector<8x512xf32> -> vector<8x512xf32>
    %84 = arith.addf %81, %83 : vector<8x512xf32>
    %85 = vector.extract_strided_slice %84 {offsets = [0, 0], sizes = [8, 128], strides = [1, 1]} : vector<8x512xf32> to vector<8x128xf32>
    %86 = arith.negf %85 : vector<8x128xf32>
    %87 = math.exp %86 : vector<8x128xf32>
    %cst_29 = arith.constant 1.000000e+00 : f32
    %88 = vector.broadcast %cst_29 : f32 to vector<8x128xf32>
    %89 = arith.addf %88, %87 : vector<8x128xf32>
    %90 = arith.divf %88, %89 : vector<8x128xf32>
    %91 = vector.extract_strided_slice %84 {offsets = [0, 128], sizes = [8, 128], strides = [1, 1]} : vector<8x512xf32> to vector<8x128xf32>
    %92 = arith.negf %91 : vector<8x128xf32>
    %93 = math.exp %92 : vector<8x128xf32>
    %cst_30 = arith.constant 1.000000e+00 : f32
    %94 = vector.broadcast %cst_30 : f32 to vector<8x128xf32>
    %95 = arith.addf %94, %93 : vector<8x128xf32>
    %96 = arith.divf %94, %95 : vector<8x128xf32>
    %97 = vector.extract_strided_slice %84 {offsets = [0, 256], sizes = [8, 128], strides = [1, 1]} : vector<8x512xf32> to vector<8x128xf32>
    %98 = math.tanh %97 : vector<8x128xf32>
    %99 = vector.extract_strided_slice %84 {offsets = [0, 384], sizes = [8, 128], strides = [1, 1]} : vector<8x512xf32> to vector<8x128xf32>
    %100 = arith.negf %99 : vector<8x128xf32>
    %101 = math.exp %100 : vector<8x128xf32>
    %cst_31 = arith.constant 1.000000e+00 : f32
    %102 = vector.broadcast %cst_31 : f32 to vector<8x128xf32>
    %103 = arith.addf %102, %101 : vector<8x128xf32>
    %104 = arith.divf %102, %103 : vector<8x128xf32>
    %105 = arith.mulf %96, %73 : vector<8x128xf32>
    %106 = arith.mulf %90, %98 : vector<8x128xf32>
    %107 = arith.addf %105, %106 : vector<8x128xf32>
    %108 = math.tanh %107 : vector<8x128xf32>
    %109 = arith.mulf %104, %108 : vector<8x128xf32>
    %110 = arith.index_cast %79 : i32 to index
    %c0_32 = arith.constant 0 : index
    %111 = vector.load %arg13[%110, %c0_32] : memref<64x128xf32, #tpu.memory_space<vmem>>, vector<8x128xf32>
    tpu.vector_store %arg13[%110, %c0_32], %109 {strides = array<i32>} : memref<64x128xf32, #tpu.memory_space<vmem>>, vector<8x128xf32>,
    %c3_i32 = arith.constant 3 : i32
    %c8_i32_33 = arith.constant 8 : i32
    %112 = arith.muli %c3_i32, %c8_i32_33 : i32
    %113 = tpu.assume_multiple %112, 8 : i32
    %114 = arith.index_cast %113 : i32 to index
    %c0_34 = arith.constant 0 : index
    %115 = vector.load %arg12[%114, %c0_34] : memref<64x512xf32, #tpu.memory_space<vmem>>, vector<8x512xf32>
    %116 = arith.truncf %109 : vector<8x128xf32> to vector<8x128xbf16>
    %cst_35 = arith.constant dense<0.000000e+00> : vector<8x512xf32>
    %117 = tpu.matmul %116, %7, %cst_35 {dimension_numbers = #tpu.dot_dimension_numbers<[1], [0], [0], [1], [0, 0, 1, 1], [], []>} : vector<8x128xbf16>, vector<128x512xbf16>, vector<8x512xf32> -> vector<8x512xf32>
    %118 = arith.addf %115, %117 : vector<8x512xf32>
    %119 = vector.extract_strided_slice %118 {offsets = [0, 0], sizes = [8, 128], strides = [1, 1]} : vector<8x512xf32> to vector<8x128xf32>
    %120 = arith.negf %119 : vector<8x128xf32>
    %121 = math.exp %120 : vector<8x128xf32>
    %cst_36 = arith.constant 1.000000e+00 : f32
    %122 = vector.broadcast %cst_36 : f32 to vector<8x128xf32>
    %123 = arith.addf %122, %121 : vector<8x128xf32>
    %124 = arith.divf %122, %123 : vector<8x128xf32>
    %125 = vector.extract_strided_slice %118 {offsets = [0, 128], sizes = [8, 128], strides = [1, 1]} : vector<8x512xf32> to vector<8x128xf32>
    %126 = arith.negf %125 : vector<8x128xf32>
    %127 = math.exp %126 : vector<8x128xf32>
    %cst_37 = arith.constant 1.000000e+00 : f32
    %128 = vector.broadcast %cst_37 : f32 to vector<8x128xf32>
    %129 = arith.addf %128, %127 : vector<8x128xf32>
    %130 = arith.divf %128, %129 : vector<8x128xf32>
    %131 = vector.extract_strided_slice %118 {offsets = [0, 256], sizes = [8, 128], strides = [1, 1]} : vector<8x512xf32> to vector<8x128xf32>
    %132 = math.tanh %131 : vector<8x128xf32>
    %133 = vector.extract_strided_slice %118 {offsets = [0, 384], sizes = [8, 128], strides = [1, 1]} : vector<8x512xf32> to vector<8x128xf32>
    %134 = arith.negf %133 : vector<8x128xf32>
    %135 = math.exp %134 : vector<8x128xf32>
    %cst_38 = arith.constant 1.000000e+00 : f32
    %136 = vector.broadcast %cst_38 : f32 to vector<8x128xf32>
    %137 = arith.addf %136, %135 : vector<8x128xf32>
    %138 = arith.divf %136, %137 : vector<8x128xf32>
    %139 = arith.mulf %130, %107 : vector<8x128xf32>
    %140 = arith.mulf %124, %132 : vector<8x128xf32>
    %141 = arith.addf %139, %140 : vector<8x128xf32>
    %142 = math.tanh %141 : vector<8x128xf32>
    %143 = arith.mulf %138, %142 : vector<8x128xf32>
    %144 = arith.index_cast %113 : i32 to index
    %c0_39 = arith.constant 0 : index
    %145 = vector.load %arg13[%144, %c0_39] : memref<64x128xf32, #tpu.memory_space<vmem>>, vector<8x128xf32>
    tpu.vector_store %arg13[%144, %c0_39], %143 {strides = array<i32>} : memref<64x128xf32, #tpu.memory_space<vmem>>, vector<8x128xf32>,
    %c4_i32 = arith.constant 4 : i32
    %c8_i32_40 = arith.constant 8 : i32
    %146 = arith.muli %c4_i32, %c8_i32_40 : i32
    %147 = tpu.assume_multiple %146, 8 : i32
    %148 = arith.index_cast %147 : i32 to index
    %c0_41 = arith.constant 0 : index
    %149 = vector.load %arg12[%148, %c0_41] : memref<64x512xf32, #tpu.memory_space<vmem>>, vector<8x512xf32>
    %150 = arith.truncf %143 : vector<8x128xf32> to vector<8x128xbf16>
    %cst_42 = arith.constant dense<0.000000e+00> : vector<8x512xf32>
    %151 = tpu.matmul %150, %7, %cst_42 {dimension_numbers = #tpu.dot_dimension_numbers<[1], [0], [0], [1], [0, 0, 1, 1], [], []>} : vector<8x128xbf16>, vector<128x512xbf16>, vector<8x512xf32> -> vector<8x512xf32>
    %152 = arith.addf %149, %151 : vector<8x512xf32>
    %153 = vector.extract_strided_slice %152 {offsets = [0, 0], sizes = [8, 128], strides = [1, 1]} : vector<8x512xf32> to vector<8x128xf32>
    %154 = arith.negf %153 : vector<8x128xf32>
    %155 = math.exp %154 : vector<8x128xf32>
    %cst_43 = arith.constant 1.000000e+00 : f32
    %156 = vector.broadcast %cst_43 : f32 to vector<8x128xf32>
    %157 = arith.addf %156, %155 : vector<8x128xf32>
    %158 = arith.divf %156, %157 : vector<8x128xf32>
    %159 = vector.extract_strided_slice %152 {offsets = [0, 128], sizes = [8, 128], strides = [1, 1]} : vector<8x512xf32> to vector<8x128xf32>
    %160 = arith.negf %159 : vector<8x128xf32>
    %161 = math.exp %160 : vector<8x128xf32>
    %cst_44 = arith.constant 1.000000e+00 : f32
    %162 = vector.broadcast %cst_44 : f32 to vector<8x128xf32>
    %163 = arith.addf %162, %161 : vector<8x128xf32>
    %164 = arith.divf %162, %163 : vector<8x128xf32>
    %165 = vector.extract_strided_slice %152 {offsets = [0, 256], sizes = [8, 128], strides = [1, 1]} : vector<8x512xf32> to vector<8x128xf32>
    %166 = math.tanh %165 : vector<8x128xf32>
    %167 = vector.extract_strided_slice %152 {offsets = [0, 384], sizes = [8, 128], strides = [1, 1]} : vector<8x512xf32> to vector<8x128xf32>
    %168 = arith.negf %167 : vector<8x128xf32>
    %169 = math.exp %168 : vector<8x128xf32>
    %cst_45 = arith.constant 1.000000e+00 : f32
    %170 = vector.broadcast %cst_45 : f32 to vector<8x128xf32>
    %171 = arith.addf %170, %169 : vector<8x128xf32>
    %172 = arith.divf %170, %171 : vector<8x128xf32>
    %173 = arith.mulf %164, %141 : vector<8x128xf32>
    %174 = arith.mulf %158, %166 : vector<8x128xf32>
    %175 = arith.addf %173, %174 : vector<8x128xf32>
    %176 = math.tanh %175 : vector<8x128xf32>
    %177 = arith.mulf %172, %176 : vector<8x128xf32>
    %178 = arith.index_cast %147 : i32 to index
    %c0_46 = arith.constant 0 : index
    %179 = vector.load %arg13[%178, %c0_46] : memref<64x128xf32, #tpu.memory_space<vmem>>, vector<8x128xf32>
    tpu.vector_store %arg13[%178, %c0_46], %177 {strides = array<i32>} : memref<64x128xf32, #tpu.memory_space<vmem>>, vector<8x128xf32>,
    %c5_i32 = arith.constant 5 : i32
    %c8_i32_47 = arith.constant 8 : i32
    %180 = arith.muli %c5_i32, %c8_i32_47 : i32
    %181 = tpu.assume_multiple %180, 8 : i32
    %182 = arith.index_cast %181 : i32 to index
    %c0_48 = arith.constant 0 : index
    %183 = vector.load %arg12[%182, %c0_48] : memref<64x512xf32, #tpu.memory_space<vmem>>, vector<8x512xf32>
    %184 = arith.truncf %177 : vector<8x128xf32> to vector<8x128xbf16>
    %cst_49 = arith.constant dense<0.000000e+00> : vector<8x512xf32>
    %185 = tpu.matmul %184, %7, %cst_49 {dimension_numbers = #tpu.dot_dimension_numbers<[1], [0], [0], [1], [0, 0, 1, 1], [], []>} : vector<8x128xbf16>, vector<128x512xbf16>, vector<8x512xf32> -> vector<8x512xf32>
    %186 = arith.addf %183, %185 : vector<8x512xf32>
    %187 = vector.extract_strided_slice %186 {offsets = [0, 0], sizes = [8, 128], strides = [1, 1]} : vector<8x512xf32> to vector<8x128xf32>
    %188 = arith.negf %187 : vector<8x128xf32>
    %189 = math.exp %188 : vector<8x128xf32>
    %cst_50 = arith.constant 1.000000e+00 : f32
    %190 = vector.broadcast %cst_50 : f32 to vector<8x128xf32>
    %191 = arith.addf %190, %189 : vector<8x128xf32>
    %192 = arith.divf %190, %191 : vector<8x128xf32>
    %193 = vector.extract_strided_slice %186 {offsets = [0, 128], sizes = [8, 128], strides = [1, 1]} : vector<8x512xf32> to vector<8x128xf32>
    %194 = arith.negf %193 : vector<8x128xf32>
    %195 = math.exp %194 : vector<8x128xf32>
    %cst_51 = arith.constant 1.000000e+00 : f32
    %196 = vector.broadcast %cst_51 : f32 to vector<8x128xf32>
    %197 = arith.addf %196, %195 : vector<8x128xf32>
    %198 = arith.divf %196, %197 : vector<8x128xf32>
    %199 = vector.extract_strided_slice %186 {offsets = [0, 256], sizes = [8, 128], strides = [1, 1]} : vector<8x512xf32> to vector<8x128xf32>
    %200 = math.tanh %199 : vector<8x128xf32>
    %201 = vector.extract_strided_slice %186 {offsets = [0, 384], sizes = [8, 128], strides = [1, 1]} : vector<8x512xf32> to vector<8x128xf32>
    %202 = arith.negf %201 : vector<8x128xf32>
    %203 = math.exp %202 : vector<8x128xf32>
    %cst_52 = arith.constant 1.000000e+00 : f32
    %204 = vector.broadcast %cst_52 : f32 to vector<8x128xf32>
    %205 = arith.addf %204, %203 : vector<8x128xf32>
    %206 = arith.divf %204, %205 : vector<8x128xf32>
    %207 = arith.mulf %198, %175 : vector<8x128xf32>
    %208 = arith.mulf %192, %200 : vector<8x128xf32>
    %209 = arith.addf %207, %208 : vector<8x128xf32>
    %210 = math.tanh %209 : vector<8x128xf32>
    %211 = arith.mulf %206, %210 : vector<8x128xf32>
    %212 = arith.index_cast %181 : i32 to index
    %c0_53 = arith.constant 0 : index
    %213 = vector.load %arg13[%212, %c0_53] : memref<64x128xf32, #tpu.memory_space<vmem>>, vector<8x128xf32>
    tpu.vector_store %arg13[%212, %c0_53], %211 {strides = array<i32>} : memref<64x128xf32, #tpu.memory_space<vmem>>, vector<8x128xf32>,
    %c6_i32 = arith.constant 6 : i32
    %c8_i32_54 = arith.constant 8 : i32
    %214 = arith.muli %c6_i32, %c8_i32_54 : i32
    %215 = tpu.assume_multiple %214, 8 : i32
    %216 = arith.index_cast %215 : i32 to index
    %c0_55 = arith.constant 0 : index
    %217 = vector.load %arg12[%216, %c0_55] : memref<64x512xf32, #tpu.memory_space<vmem>>, vector<8x512xf32>
    %218 = arith.truncf %211 : vector<8x128xf32> to vector<8x128xbf16>
    %cst_56 = arith.constant dense<0.000000e+00> : vector<8x512xf32>
    %219 = tpu.matmul %218, %7, %cst_56 {dimension_numbers = #tpu.dot_dimension_numbers<[1], [0], [0], [1], [0, 0, 1, 1], [], []>} : vector<8x128xbf16>, vector<128x512xbf16>, vector<8x512xf32> -> vector<8x512xf32>
    %220 = arith.addf %217, %219 : vector<8x512xf32>
    %221 = vector.extract_strided_slice %220 {offsets = [0, 0], sizes = [8, 128], strides = [1, 1]} : vector<8x512xf32> to vector<8x128xf32>
    %222 = arith.negf %221 : vector<8x128xf32>
    %223 = math.exp %222 : vector<8x128xf32>
    %cst_57 = arith.constant 1.000000e+00 : f32
    %224 = vector.broadcast %cst_57 : f32 to vector<8x128xf32>
    %225 = arith.addf %224, %223 : vector<8x128xf32>
    %226 = arith.divf %224, %225 : vector<8x128xf32>
    %227 = vector.extract_strided_slice %220 {offsets = [0, 128], sizes = [8, 128], strides = [1, 1]} : vector<8x512xf32> to vector<8x128xf32>
    %228 = arith.negf %227 : vector<8x128xf32>
    %229 = math.exp %228 : vector<8x128xf32>
    %cst_58 = arith.constant 1.000000e+00 : f32
    %230 = vector.broadcast %cst_58 : f32 to vector<8x128xf32>
    %231 = arith.addf %230, %229 : vector<8x128xf32>
    %232 = arith.divf %230, %231 : vector<8x128xf32>
    %233 = vector.extract_strided_slice %220 {offsets = [0, 256], sizes = [8, 128], strides = [1, 1]} : vector<8x512xf32> to vector<8x128xf32>
    %234 = math.tanh %233 : vector<8x128xf32>
    %235 = vector.extract_strided_slice %220 {offsets = [0, 384], sizes = [8, 128], strides = [1, 1]} : vector<8x512xf32> to vector<8x128xf32>
    %236 = arith.negf %235 : vector<8x128xf32>
    %237 = math.exp %236 : vector<8x128xf32>
    %cst_59 = arith.constant 1.000000e+00 : f32
    %238 = vector.broadcast %cst_59 : f32 to vector<8x128xf32>
    %239 = arith.addf %238, %237 : vector<8x128xf32>
    %240 = arith.divf %238, %239 : vector<8x128xf32>
    %241 = arith.mulf %232, %209 : vector<8x128xf32>
    %242 = arith.mulf %226, %234 : vector<8x128xf32>
    %243 = arith.addf %241, %242 : vector<8x128xf32>
    %244 = math.tanh %243 : vector<8x128xf32>
    %245 = arith.mulf %240, %244 : vector<8x128xf32>
    %246 = arith.index_cast %215 : i32 to index
    %c0_60 = arith.constant 0 : index
    %247 = vector.load %arg13[%246, %c0_60] : memref<64x128xf32, #tpu.memory_space<vmem>>, vector<8x128xf32>
    tpu.vector_store %arg13[%246, %c0_60], %245 {strides = array<i32>} : memref<64x128xf32, #tpu.memory_space<vmem>>, vector<8x128xf32>,
    %c7_i32 = arith.constant 7 : i32
    %c8_i32_61 = arith.constant 8 : i32
    %248 = arith.muli %c7_i32, %c8_i32_61 : i32
    %249 = tpu.assume_multiple %248, 8 : i32
    %250 = arith.index_cast %249 : i32 to index
    %c0_62 = arith.constant 0 : index
    %251 = vector.load %arg12[%250, %c0_62] : memref<64x512xf32, #tpu.memory_space<vmem>>, vector<8x512xf32>
    %252 = arith.truncf %245 : vector<8x128xf32> to vector<8x128xbf16>
    %cst_63 = arith.constant dense<0.000000e+00> : vector<8x512xf32>
    %253 = tpu.matmul %252, %7, %cst_63 {dimension_numbers = #tpu.dot_dimension_numbers<[1], [0], [0], [1], [0, 0, 1, 1], [], []>} : vector<8x128xbf16>, vector<128x512xbf16>, vector<8x512xf32> -> vector<8x512xf32>
    %254 = arith.addf %251, %253 : vector<8x512xf32>
    %255 = vector.extract_strided_slice %254 {offsets = [0, 0], sizes = [8, 128], strides = [1, 1]} : vector<8x512xf32> to vector<8x128xf32>
    %256 = arith.negf %255 : vector<8x128xf32>
    %257 = math.exp %256 : vector<8x128xf32>
    %cst_64 = arith.constant 1.000000e+00 : f32
    %258 = vector.broadcast %cst_64 : f32 to vector<8x128xf32>
    %259 = arith.addf %258, %257 : vector<8x128xf32>
    %260 = arith.divf %258, %259 : vector<8x128xf32>
    %261 = vector.extract_strided_slice %254 {offsets = [0, 128], sizes = [8, 128], strides = [1, 1]} : vector<8x512xf32> to vector<8x128xf32>
    %262 = arith.negf %261 : vector<8x128xf32>
    %263 = math.exp %262 : vector<8x128xf32>
    %cst_65 = arith.constant 1.000000e+00 : f32
    %264 = vector.broadcast %cst_65 : f32 to vector<8x128xf32>
    %265 = arith.addf %264, %263 : vector<8x128xf32>
    %266 = arith.divf %264, %265 : vector<8x128xf32>
    %267 = vector.extract_strided_slice %254 {offsets = [0, 256], sizes = [8, 128], strides = [1, 1]} : vector<8x512xf32> to vector<8x128xf32>
    %268 = math.tanh %267 : vector<8x128xf32>
    %269 = vector.extract_strided_slice %254 {offsets = [0, 384], sizes = [8, 128], strides = [1, 1]} : vector<8x512xf32> to vector<8x128xf32>
    %270 = arith.negf %269 : vector<8x128xf32>
    %271 = math.exp %270 : vector<8x128xf32>
    %cst_66 = arith.constant 1.000000e+00 : f32
    %272 = vector.broadcast %cst_66 : f32 to vector<8x128xf32>
    %273 = arith.addf %272, %271 : vector<8x128xf32>
    %274 = arith.divf %272, %273 : vector<8x128xf32>
    %275 = arith.mulf %266, %243 : vector<8x128xf32>
    %276 = arith.mulf %260, %268 : vector<8x128xf32>
    %277 = arith.addf %275, %276 : vector<8x128xf32>
    %278 = math.tanh %277 : vector<8x128xf32>
    %279 = arith.mulf %274, %278 : vector<8x128xf32>
    %280 = arith.index_cast %249 : i32 to index
    %c0_67 = arith.constant 0 : index
    %281 = vector.load %arg13[%280, %c0_67] : memref<64x128xf32, #tpu.memory_space<vmem>>, vector<8x128xf32>
    tpu.vector_store %arg13[%280, %c0_67], %279 {strides = array<i32>} : memref<64x128xf32, #tpu.memory_space<vmem>>, vector<8x128xf32>,
    %c8_i32_68 = arith.constant 8 : i32
    %c0_69 = arith.constant 0 : index
    %c0_70 = arith.constant 0 : index
    %282 = vector.load %arg10[%c0_69, %c0_70] : memref<8x128xf32, #tpu.memory_space<vmem>>, vector<8x128xf32>
    tpu.vector_store %arg10[%c0_69, %c0_70], %279 {strides = array<i32>} : memref<8x128xf32, #tpu.memory_space<vmem>>, vector<8x128xf32>,
    %c0_71 = arith.constant 0 : index
    %c0_72 = arith.constant 0 : index
    %283 = vector.load %arg11[%c0_71, %c0_72] : memref<8x128xf32, #tpu.memory_space<vmem>>, vector<8x128xf32>
    tpu.vector_store %arg11[%c0_71, %c0_72], %277 {strides = array<i32>} : memref<8x128xf32, #tpu.memory_space<vmem>>, vector<8x128xf32>,
    %c0_73 = arith.constant 0 : index
    %c0_74 = arith.constant 0 : index
    %284 = vector.load %arg13[%c0_73, %c0_74] : memref<64x128xf32, #tpu.memory_space<vmem>>, vector<64x128xf32>
    %285 = arith.truncf %284 : vector<64x128xf32> to vector<64x128xbf16>
    %c0_75 = arith.constant 0 : index
    %c0_76 = arith.constant 0 : index
    %286 = vector.load %arg7[%c0_75, %c0_76] : memref<128x128xbf16, #tpu.memory_space<vmem>>, vector<128x128xbf16>
    %cst_77 = arith.constant dense<0.000000e+00> : vector<64x128xf32>
    %287 = tpu.matmul %285, %286, %cst_77 {dimension_numbers = #tpu.dot_dimension_numbers<[1], [0], [0], [1], [0, 0, 1, 1], [], []>} : vector<64x128xbf16>, vector<128x128xbf16>, vector<64x128xf32> -> vector<64x128xf32>
    %c0_78 = arith.constant 0 : index
    %c0_79 = arith.constant 0 : index
    %288 = vector.load %arg8[%c0_78, %c0_79] : memref<1x128xf32, #tpu.memory_space<vmem>>, vector<1x128xf32>
    %289 = vector.broadcast %288 : vector<1x128xf32> to vector<64x128xf32>
    %290 = arith.addf %287, %289 : vector<64x128xf32>
    %c0_80 = arith.constant 0 : index
    %c0_81 = arith.constant 0 : index
    %291 = vector.load %arg9[%c0_80, %c0_81] : memref<64x128xf32, #tpu.memory_space<vmem>>, vector<64x128xf32>
    tpu.vector_store %arg9[%c0_80, %c0_81], %290 {strides = array<i32>} : memref<64x128xf32, #tpu.memory_space<vmem>>, vector<64x128xf32>,
    return
  }
  func.func @transform_0(%arg0: i32) -> (i32, i32) {
    %c0_i32 = arith.constant 0 : i32
    %c0_i32_0 = arith.constant 0 : i32
    %c0_i32_1 = arith.constant 0 : i32
    return %c0_i32, %c0_i32_0 : i32, i32
  }
  func.func @transform_1(%arg0: i32) -> (i32, i32) {
    %c0_i32 = arith.constant 0 : i32
    %c0_i32_0 = arith.constant 0 : i32
    %c0_i32_1 = arith.constant 0 : i32
    return %c0_i32, %c0_i32_0 : i32, i32
  }
  func.func @transform_2(%arg0: i32) -> (i32, i32) {
    %c0_i32 = arith.constant 0 : i32
    %c0_i32_0 = arith.constant 0 : i32
    %c0_i32_1 = arith.constant 0 : i32
    return %c0_i32, %c0_i32_0 : i32, i32
  }
  func.func @transform_3(%arg0: i32) -> (i32, i32) {
    %c0_i32 = arith.constant 0 : i32
    %c0_i32_0 = arith.constant 0 : i32
    %c0_i32_1 = arith.constant 0 : i32
    return %c0_i32, %c0_i32_0 : i32, i32
  }
  func.func @transform_4(%arg0: i32) -> (i32, i32) {
    %c0_i32 = arith.constant 0 : i32
    %c0_i32_0 = arith.constant 0 : i32
    %c0_i32_1 = arith.constant 0 : i32
    return %c0_i32, %c0_i32_0 : i32, i32
  }
  func.func @transform_5(%arg0: i32) -> (i32, i32) {
    %c0_i32 = arith.constant 0 : i32
    %c0_i32_0 = arith.constant 0 : i32
    %c0_i32_1 = arith.constant 0 : i32
    return %c0_i32, %c0_i32_0 : i32, i32
  }
  func.func @transform_6(%arg0: i32) -> (i32, i32) {
    %c0_i32 = arith.constant 0 : i32
    %c0_i32_0 = arith.constant 0 : i32
    %c0_i32_1 = arith.constant 0 : i32
    return %c0_i32, %c0_i32_0 : i32, i32
  }
  func.func @transform_7(%arg0: i32) -> (i32, i32) {
    %c0_i32 = arith.constant 0 : i32
    %c0_i32_0 = arith.constant 0 : i32
    %c0_i32_1 = arith.constant 0 : i32
    return %c0_i32, %c0_i32_0 : i32, i32
  }
  func.func @transform_8(%arg0: i32) -> (i32, i32) {
    %c0_i32 = arith.constant 0 : i32
    %c0_i32_0 = arith.constant 0 : i32
    %c0_i32_1 = arith.constant 0 : i32
    return %c0_i32, %c0_i32_0 : i32, i32
  }
  func.func @transform_9(%arg0: i32) -> (i32, i32) {
    %c0_i32 = arith.constant 0 : i32
    %c0_i32_0 = arith.constant 0 : i32
    %c0_i32_1 = arith.constant 0 : i32
    return %c0_i32, %c0_i32_0 : i32, i32
  }
  func.func @transform_10(%arg0: i32) -> (i32, i32) {
    %c0_i32 = arith.constant 0 : i32
    %c0_i32_0 = arith.constant 0 : i32
    %c0_i32_1 = arith.constant 0 : i32
    return %c0_i32, %c0_i32_0 : i32, i32
  }
}

</mosaic_0001>

<llo_original>
// kernel: tpu_custom_call.1
$region0: #{tpu_custom_call.1}
  #allocation0 [shape = 'u32[]', space=smem, size = 0x4, offset = 0x4, fixed_abs, tag = 'smem constant byte address 0x4 - core index']
  #allocation1 [shape = 'u32[144,128]{1,0:T(1,128)}', space=vmem, size = 0x12000, scoped, tag = 'internal scratch']
  #allocation2 [shape = 'f32[64,512]{1,0:T(8,128)}', space=vmem, size = 0x20000, scoped, tag = 'scratch operand']
  #allocation3 [shape = 'f32[64,128]{1,0:T(8,128)}', space=vmem, size = 0x8000, scoped, tag = 'scratch operand']
  %s0 = inlined_call_operand.vmem [shape: bf16[64,32], index: 0, kind: input, shape index: {}]
  %s1 = inlined_call_operand.vmem [shape: f32[8,128], index: 1, kind: input, shape index: {}]
  %s2 = inlined_call_operand.vmem [shape: f32[8,128], index: 2, kind: input, shape index: {}]
  %s3 = inlined_call_operand.hbm [shape: bf16[32,512], index: 3, kind: input, shape index: {}]
  %s4 = inlined_call_operand.hbm [shape: bf16[128,512], index: 4, kind: input, shape index: {}]
  %s5 = inlined_call_operand.vmem [shape: f32[1,512], index: 5, kind: input, shape index: {}]
  %s6 = inlined_call_operand.hbm [shape: bf16[128,128], index: 6, kind: input, shape index: {}]
  %s7 = inlined_call_operand.vmem [shape: f32[1,128], index: 7, kind: input, shape index: {}]
  %s8 = inlined_call_operand.hbm [shape: f32[64,128], index: 8, kind: output, shape index: {0}]
  %s9 = inlined_call_operand.hbm [shape: f32[8,128], index: 9, kind: output, shape index: {1}]
  %s10 = inlined_call_operand.hbm [shape: f32[8,128], index: 10, kind: output, shape index: {2}]
  %11 = xla_tuple %s8, %s9, %s10
  %s12 = sld [smem:[#allocation0]]
  $region70: #{tpu_custom_call.1} parent=0
    _
  %s14 = ssub.s32 1, %s12
  %s15 = scalar_select 0, %s14, %s12
  $region1: #{tpu_custom_call.1} parent=0
    #allocation4 [shape = 'u8[32768]{0}', space=vmem, size = 0x8000, scoped, tag = 'input window, operand 3, single buffered']
    #allocation5 [shape = 's32[1]{0}', space=sflag, size = 0x4, scoped, tag = 'scoped memory for tpu_custom_call.1']
    #allocation6 [shape = 's32[1]{0}', space=sflag, size = 0x4, scoped, tag = 'scoped memory for tpu_custom_call.1']
    #allocation7 [shape = 'u8[131072]{0}', space=vmem, size = 0x20000, scoped, tag = 'input window, operand 4, single buffered']
    #allocation8 [shape = 's32[1]{0}', space=sflag, size = 0x4, scoped, tag = 'scoped memory for tpu_custom_call.1']
    #allocation9 [shape = 'u8[32768]{0}', space=vmem, size = 0x8000, scoped, tag = 'input window, operand 6, single buffered']
    #allocation10 [shape = 'u8[32768]{0}', space=vmem, size = 0x8000, scoped, tag = 'output window, operand 0, single buffered']
    #allocation11 [shape = 'u8[4096]{0}', space=vmem, size = 0x1000, scoped, tag = 'output window, operand 1, single buffered']
    #allocation12 [shape = 's32[1]{0}', space=sflag, size = 0x4, scoped, tag = 'scoped memory for tpu_custom_call.1']
    #allocation13 [shape = 'u8[4096]{0}', space=vmem, size = 0x1000, scoped, tag = 'output window, operand 2, single buffered']
    %16 = vsyncpa [#allocation5], 0
    %17 = vsyncpa [#allocation8], 0
    %18 = vsyncpa [#allocation6], 0
    %19 = vsyncpa [#allocation12], 0
    // Predicated region
    $region2: #{tpu_custom_call.1} parent=1 // pred_check
      _
    $region3: #{tpu_custom_call.1} parent=1 // pred_check_branch
      %21 = sbr.rel (0) target = $region5
    $region4: #{tpu_custom_call.1} parent=1 // pred_region
      _
    $region5: #{tpu_custom_call.1} parent=1 // pred_fallthru
      _
    // Predicated region
    $region6: #{tpu_custom_call.1} parent=1 // pred_check
      _
    $region7: #{tpu_custom_call.1} parent=1 // pred_check_branch
      %23 = sbr.rel (0) target = $region9
    $region8: #{tpu_custom_call.1} parent=1 // pred_region
      _
    $region9: #{tpu_custom_call.1} parent=1 // pred_fallthru
      _
    // Predicated region
    $region10: #{tpu_custom_call.1} parent=1 // pred_check
      _
    $region11: #{tpu_custom_call.1} parent=1 // pred_check_branch
      %25 = sbr.rel (0) target = $region13
    $region12: #{tpu_custom_call.1} parent=1 // pred_region
      _
    $region13: #{tpu_custom_call.1} parent=1 // pred_fallthru
      _
    // Predicated region
    $region14: #{tpu_custom_call.1} parent=1 // pred_check
      _
    $region15: #{tpu_custom_call.1} parent=1 // pred_check_branch
      %27 = sbr.rel (0) target = $region17
    $region16: #{tpu_custom_call.1} parent=1 // pred_region
      %s29 = ssub.s32 1024, 1024
      %30 = vsyncadd [#allocation5], %s29
      %s31 = sshll.u32 [#allocation4], 4
      %s32 = int_to_ptr.vmem [resolvable:$true] %s31
      %37 = dma.hbm_to_vmem [thread:$0]  %s3, 1024, %s32, [#allocation5], 256, 256, 16
    $region17: #{tpu_custom_call.1} parent=1 // pred_fallthru
      _
    // Predicated region
    $region18: #{tpu_custom_call.1} parent=1 // pred_check
      _
    $region19: #{tpu_custom_call.1} parent=1 // pred_check_branch
      %39 = sbr.rel (0) target = $region21
    $region20: #{tpu_custom_call.1} parent=1 // pred_region
      %s41 = ssub.s32 4096, 4096
      %42 = vsyncadd [#allocation8], %s41
      %s43 = sshll.u32 [#allocation7], 4
      %s44 = int_to_ptr.vmem [resolvable:$true] %s43
      %49 = dma.hbm_to_vmem [thread:$0]  %s4, 4096, %s44, [#allocation8], 256, 256, 16
    $region21: #{tpu_custom_call.1} parent=1 // pred_fallthru
      _
    // Predicated region
    $region22: #{tpu_custom_call.1} parent=1 // pred_check
      _
    $region23: #{tpu_custom_call.1} parent=1 // pred_check_branch
      %51 = sbr.rel (0) target = $region25
    $region24: #{tpu_custom_call.1} parent=1 // pred_region
      _
    $region25: #{tpu_custom_call.1} parent=1 // pred_fallthru
      _
    // Predicated region
    $region26: #{tpu_custom_call.1} parent=1 // pred_check
      _
    $region27: #{tpu_custom_call.1} parent=1 // pred_check_branch
      %53 = sbr.rel (0) target = $region29
    $region28: #{tpu_custom_call.1} parent=1 // pred_region
      %s55 = ssub.s32 1024, 1024
      %56 = vsyncadd [#allocation8], %s55
      %s57 = sshll.u32 [#allocation9], 4
      %s58 = int_to_ptr.vmem [resolvable:$true] %s57
      %63 = dma.hbm_to_vmem [thread:$0]  %s6, 1024, %s58, [#allocation8], 64, 64, 4
    $region29: #{tpu_custom_call.1} parent=1 // pred_fallthru
      _
    // Predicated region
    $region30: #{tpu_custom_call.1} parent=1 // pred_check
      _
    $region31: #{tpu_custom_call.1} parent=1 // pred_check_branch
      %65 = sbr.rel (0) target = $region33
    $region32: #{tpu_custom_call.1} parent=1 // pred_region
      _
    $region33: #{tpu_custom_call.1} parent=1 // pred_fallthru
      _
    // Predicated region
    $region34: #{tpu_custom_call.1} parent=1 // pred_check
      _
    $region35: #{tpu_custom_call.1} parent=1 // pred_check_branch
      %67 = sbr.rel (0) target = $region37
    $region36: #{tpu_custom_call.1} parent=1 // pred_region
      %68 = dma.done [#allocation5], 1024
    $region37: #{tpu_custom_call.1} parent=1 // pred_fallthru
      _
    // Predicated region
    $region38: #{tpu_custom_call.1} parent=1 // pred_check
      _
    $region39: #{tpu_custom_call.1} parent=1 // pred_check_branch
      %70 = sbr.rel (0) target = $region41
    $region40: #{tpu_custom_call.1} parent=1 // pred_region
      %71 = dma.done [#allocation8], 4096
    $region41: #{tpu_custom_call.1} parent=1 // pred_fallthru
      _
    // Predicated region
    $region42: #{tpu_custom_call.1} parent=1 // pred_check
      _
    $region43: #{tpu_custom_call.1} parent=1 // pred_check_branch
      %73 = sbr.rel (0) target = $region45
    $region44: #{tpu_custom_call.1} parent=1 // pred_region
      %74 = dma.done [#allocation8], 1024
    $region45: #{tpu_custom_call.1} parent=1 // pred_fallthru
      _
    %v76 = vld [vmem:[%s0] sm:$0xf]
    %v77 = vld [vmem:[%s0 + $0x4] sm:$0xf]
    %v78 = vld [vmem:[%s0 + $0x8] sm:$0xf]
    %v79 = vld [vmem:[%s0 + $0xc] sm:$0xf]
    %v80 = vld [vmem:[%s0 + $0x10] sm:$0xf]
    %v81 = vld [vmem:[%s0 + $0x14] sm:$0xf]
    %v82 = vld [vmem:[%s0 + $0x18] sm:$0xf]
    %v83 = vld [vmem:[%s0 + $0x1c] sm:$0xf]
    %v84 = vld [vmem:[#allocation4] sm:$0xff]
    %v85 = vld [vmem:[#allocation4 + $0x8] sm:$0xff]
    %v86 = vld [vmem:[#allocation4 + $0x10] sm:$0xff]
    %v87 = vld [vmem:[#allocation4 + $0x18] sm:$0xff]
    %v88 = vld [vmem:[#allocation4 + $0x20] sm:$0xff]
    %v89 = vld [vmem:[#allocation4 + $0x28] sm:$0xff]
    %v90 = vld [vmem:[#allocation4 + $0x30] sm:$0xff]
    %v91 = vld [vmem:[#allocation4 + $0x38] sm:$0xff]
    %v92 = vld [vmem:[%s5] sm:$0xf]
    %v94 = vlaneseq
    %v95 = vshrl.u32 %v94, 7
    %v96 = vsub.s32 0, %v95
    %v97 = vrot.slane %v92, %v96
    %v98 = vlaneseq
    %v99 = vshrl.u32 %v98, 7
    %v100 = vsub.s32 1, %v99
    %v101 = vrot.slane %v92, %v100
    %v102 = vlaneseq
    %v103 = vshrl.u32 %v102, 7
    %v104 = vsub.s32 2, %v103
    %v105 = vrot.slane %v92, %v104
    %v106 = vlaneseq
    %v107 = vshrl.u32 %v106, 7
    %v108 = vsub.s32 3, %v107
    %v109 = vrot.slane %v92, %v108
    %v122 = vunpack.c.l.b16 %v76
    %v123 = vunpack.c.l.b16 %v77
    %v124 = vunpack.c.l.b16 %v78
    %v125 = vunpack.c.l.b16 %v79
    %v126 = vunpack.c.l.b16 %v80
    %v127 = vunpack.c.l.b16 %v81
    %v128 = vunpack.c.l.b16 %v82
    %v129 = vunpack.c.l.b16 %v83
    %v130 = vpack.c.b16 %v123, %v122
    %v131 = vpack.c.b16 %v125, %v124
    %v132 = vpack.c.b16 %v127, %v126
    %v133 = vpack.c.b16 %v129, %v128
    %v142 = vunpack.c.l.b16 %v84
    %v143 = vunpack.c.h.b16 %v84
    %v144 = vunpack.c.l.b16 %v85
    %v145 = vunpack.c.h.b16 %v85
    %v146 = vunpack.c.l.b16 %v86
    %v147 = vunpack.c.h.b16 %v86
    %v148 = vunpack.c.l.b16 %v87
    %v149 = vunpack.c.h.b16 %v87
    %v150 = vunpack.c.l.b16 %v88
    %v151 = vunpack.c.h.b16 %v88
    %v152 = vunpack.c.l.b16 %v89
    %v153 = vunpack.c.h.b16 %v89
    %v154 = vunpack.c.l.b16 %v90
    %v155 = vunpack.c.h.b16 %v90
    %v156 = vunpack.c.l.b16 %v91
    %v157 = vunpack.c.h.b16 %v91
    %v158 = vpack.c.b16 %v146, %v142
    %v159 = vpack.c.b16 %v147, %v143
    %v160 = vpack.c.b16 %v148, %v144
    %v161 = vpack.c.b16 %v149, %v145
    %v162 = vpack.c.b16 %v154, %v150
    %v163 = vpack.c.b16 %v155, %v151
    %v164 = vpack.c.b16 %v156, %v152
    %v165 = vpack.c.b16 %v157, %v153
    %vm174 = vcmask 261120
    %v176 = vsel %vm174, %v130, 0
    %v179 = vsel %vm174, %v131, 0
    %v182 = vsel %vm174, %v132, 0
    %v185 = vsel %vm174, %v133, 0
    %187 = vmatprep.subr.bf16.mxu0 0
    %188 = vmatpush1.bf16.msra.mxu0 0
    %189 = vmatprep.subr.bf16.mxu0 0
    %190 = vmatpush1.bf16.msra.mxu0 0
    %191 = vmatprep.subr.bf16.mxu0 0
    %192 = vmatpush1.bf16.msra.mxu0 0
    %193 = vmatprep.subr.bf16.mxu0 0
    %194 = vmatpush1.bf16.msra.mxu0 0
    %195 = vmatprep.subr.bf16.mxu0 0
    %196 = vmatpush1.bf16.msra.mxu0 0
    %197 = vmatprep.subr.bf16.mxu0 0
    %198 = vmatpush1.bf16.msra.mxu0 0
    %199 = vmatprep.subr.bf16.mxu0 %v163
    %200 = vmatpush1.bf16.msra.mxu0 %v162
    %201 = vmatprep.subr.bf16.mxu0 %v159
    %202 = vmatpush1.bf16.msra.mxu0 %v158
    %203 = vmatprep.subr.bf16.mxu0 0
    %204 = vmatpush2.bf16.msra.mxu0 0
    %205 = vmatprep.subr.bf16.mxu0 0
    %206 = vmatpush2.bf16.msra.mxu0 0
    %207 = vmatprep.subr.bf16.mxu0 0
    %208 = vmatpush2.bf16.msra.mxu0 0
    %209 = vmatprep.subr.bf16.mxu0 0
    %210 = vmatpush2.bf16.msra.mxu0 0
    %211 = vmatprep.subr.bf16.mxu0 0
    %212 = vmatpush2.bf16.msra.mxu0 0
    %213 = vmatprep.subr.bf16.mxu0 0
    %214 = vmatpush2.bf16.msra.mxu0 0
    %215 = vmatprep.subr.bf16.mxu0 0
    %216 = vmatpush2.bf16.msra.mxu0 0
    %217 = vmatprep.subr.bf16.mxu0 0
    %218 = vmatpush2.bf16.msra.mxu0 0
    %219 = vmatprep.mubr.bf16.mxu0 0
    %220 = vmatmul.mubr.bf16.gmra.mxu0 %v176
    %v221 = vpop.f32.mrf.mxu0
    %v222 = vadd.f32 %v97, %v221
    %v223 = vpop.f32.mrf.mxu0
    %v224 = vadd.f32 %v101, %v223
    %v225 = vpop.f32.mrf.mxu0
    %v226 = vadd.f32 %v97, %v225
    %v227 = vpop.f32.mrf.mxu0
    %v228 = vadd.f32 %v101, %v227
    %229 = vmatprep.mubr.bf16.mxu0 0
    %230 = vmatmul.mubr.bf16.gmra.mxu0 %v179
    %v231 = vpop.f32.mrf.mxu0
    %v232 = vadd.f32 %v97, %v231
    %v233 = vpop.f32.mrf.mxu0
    %v234 = vadd.f32 %v101, %v233
    %v235 = vpop.f32.mrf.mxu0
    %v236 = vadd.f32 %v97, %v235
    %v237 = vpop.f32.mrf.mxu0
    %v238 = vadd.f32 %v101, %v237
    %239 = vmatprep.mubr.bf16.mxu0 0
    %240 = vmatmul.mubr.bf16.gmra.mxu0 %v182
    %v241 = vpop.f32.mrf.mxu0
    %v242 = vadd.f32 %v97, %v241
    %v243 = vpop.f32.mrf.mxu0
    %v244 = vadd.f32 %v101, %v243
    %v245 = vpop.f32.mrf.mxu0
    %v246 = vadd.f32 %v97, %v245
    %v247 = vpop.f32.mrf.mxu0
    %v248 = vadd.f32 %v101, %v247
    %249 = vmatprep.mubr.bf16.mxu0 0
    %250 = vmatmul.mubr.bf16.gmra.mxu0 %v185
    %v251 = vpop.f32.mrf.mxu0
    %v252 = vadd.f32 %v97, %v251
    %v253 = vpop.f32.mrf.mxu0
    %v254 = vadd.f32 %v101, %v253
    %v255 = vpop.f32.mrf.mxu0
    %v256 = vadd.f32 %v97, %v255
    %v257 = vpop.f32.mrf.mxu0
    %v258 = vadd.f32 %v101, %v257
    %259 = vdwg.mxu0
    %260 = vmatprep.subr.bf16.mxu0 0
    %261 = vmatpush1.bf16.msra.mxu0 0
    %262 = vmatprep.subr.bf16.mxu0 0
    %263 = vmatpush1.bf16.msra.mxu0 0
    %264 = vmatprep.subr.bf16.mxu0 0
    %265 = vmatpush1.bf16.msra.mxu0 0
    %266 = vmatprep.subr.bf16.mxu0 0
    %267 = vmatpush1.bf16.msra.mxu0 0
    %268 = vmatprep.subr.bf16.mxu0 0
    %269 = vmatpush1.bf16.msra.mxu0 0
    %270 = vmatprep.subr.bf16.mxu0 0
    %271 = vmatpush1.bf16.msra.mxu0 0
    %272 = vmatprep.subr.bf16.mxu0 %v165
    %273 = vmatpush1.bf16.msra.mxu0 %v164
    %274 = vmatprep.subr.bf16.mxu0 %v161
    %275 = vmatpush1.bf16.msra.mxu0 %v160
    %276 = vmatprep.subr.bf16.mxu0 0
    %277 = vmatpush2.bf16.msra.mxu0 0
    %278 = vmatprep.subr.bf16.mxu0 0
    %279 = vmatpush2.bf16.msra.mxu0 0
    %280 = vmatprep.subr.bf16.mxu0 0
    %281 = vmatpush2.bf16.msra.mxu0 0
    %282 = vmatprep.subr.bf16.mxu0 0
    %283 = vmatpush2.bf16.msra.mxu0 0
    %284 = vmatprep.subr.bf16.mxu0 0
    %285 = vmatpush2.bf16.msra.mxu0 0
    %286 = vmatprep.subr.bf16.mxu0 0
    %287 = vmatpush2.bf16.msra.mxu0 0
    %288 = vmatprep.subr.bf16.mxu0 0
    %289 = vmatpush2.bf16.msra.mxu0 0
    %290 = vmatprep.subr.bf16.mxu0 0
    %291 = vmatpush2.bf16.msra.mxu0 0
    %292 = vmatprep.mubr.bf16.mxu0 0
    %293 = vmatmul.mubr.bf16.gmra.mxu0 %v176
    %v294 = vpop.f32.mrf.mxu0
    %v295 = vadd.f32 %v105, %v294
    %v296 = vpop.f32.mrf.mxu0
    %v297 = vadd.f32 %v109, %v296
    %v298 = vpop.f32.mrf.mxu0
    %v299 = vadd.f32 %v105, %v298
    %v300 = vpop.f32.mrf.mxu0
    %v301 = vadd.f32 %v109, %v300
    %302 = vmatprep.mubr.bf16.mxu0 0
    %303 = vmatmul.mubr.bf16.gmra.mxu0 %v179
    %v304 = vpop.f32.mrf.mxu0
    %v305 = vadd.f32 %v105, %v304
    %v306 = vpop.f32.mrf.mxu0
    %v307 = vadd.f32 %v109, %v306
    %v308 = vpop.f32.mrf.mxu0
    %v309 = vadd.f32 %v105, %v308
    %v310 = vpop.f32.mrf.mxu0
    %v311 = vadd.f32 %v109, %v310
    %312 = vmatprep.mubr.bf16.mxu0 0
    %313 = vmatmul.mubr.bf16.gmra.mxu0 %v182
    %v314 = vpop.f32.mrf.mxu0
    %v315 = vadd.f32 %v105, %v314
    %v316 = vpop.f32.mrf.mxu0
    %v317 = vadd.f32 %v109, %v316
    %v318 = vpop.f32.mrf.mxu0
    %v319 = vadd.f32 %v105, %v318
    %v320 = vpop.f32.mrf.mxu0
    %v321 = vadd.f32 %v109, %v320
    %322 = vmatprep.mubr.bf16.mxu0 0
    %323 = vmatmul.mubr.bf16.gmra.mxu0 %v185
    %v324 = vpop.f32.mrf.mxu0
    %v325 = vadd.f32 %v105, %v324
    %v326 = vpop.f32.mrf.mxu0
    %v327 = vadd.f32 %v109, %v326
    %v328 = vpop.f32.mrf.mxu0
    %v329 = vadd.f32 %v105, %v328
    %v330 = vpop.f32.mrf.mxu0
    %v331 = vadd.f32 %v109, %v330
    %332 = vdwg.mxu0
    %333 = vst [vmem:[#allocation2] sm:$0xff] %v222
    %334 = vst [vmem:[#allocation2 + $0x8] sm:$0xff] %v224
    %335 = vst [vmem:[#allocation2 + $0x10] sm:$0xff] %v295
    %336 = vst [vmem:[#allocation2 + $0x18] sm:$0xff] %v297
    %337 = vst [vmem:[#allocation2 + $0x20] sm:$0xff] %v226
    %338 = vst [vmem:[#allocation2 + $0x28] sm:$0xff] %v228
    %339 = vst [vmem:[#allocation2 + $0x30] sm:$0xff] %v299
    %340 = vst [vmem:[#allocation2 + $0x38] sm:$0xff] %v301
    %341 = vst [vmem:[#allocation2 + $0x40] sm:$0xff] %v232
    %342 = vst [vmem:[#allocation2 + $0x48] sm:$0xff] %v234
    %343 = vst [vmem:[#allocation2 + $0x50] sm:$0xff] %v305
    %344 = vst [vmem:[#allocation2 + $0x58] sm:$0xff] %v307
    %345 = vst [vmem:[#allocation2 + $0x60] sm:$0xff] %v236
    %346 = vst [vmem:[#allocation2 + $0x68] sm:$0xff] %v238
    %347 = vst [vmem:[#allocation2 + $0x70] sm:$0xff] %v309
    %348 = vst [vmem:[#allocation2 + $0x78] sm:$0xff] %v311
    %349 = vst [vmem:[#allocation2 + $0x80] sm:$0xff] %v242
    %350 = vst [vmem:[#allocation2 + $0x88] sm:$0xff] %v244
    %351 = vst [vmem:[#allocation2 + $0x90] sm:$0xff] %v315
    %352 = vst [vmem:[#allocation2 + $0x98] sm:$0xff] %v317
    %353 = vst [vmem:[#allocation2 + $0xa0] sm:$0xff] %v246
    %354 = vst [vmem:[#allocation2 + $0xa8] sm:$0xff] %v248
    %355 = vst [vmem:[#allocation2 + $0xb0] sm:$0xff] %v319
    %356 = vst [vmem:[#allocation2 + $0xb8] sm:$0xff] %v321
    %357 = vst [vmem:[#allocation2 + $0xc0] sm:$0xff] %v252
    %358 = vst [vmem:[#allocation2 + $0xc8] sm:$0xff] %v254
    %359 = vst [vmem:[#allocation2 + $0xd0] sm:$0xff] %v325
    %360 = vst [vmem:[#allocation2 + $0xd8] sm:$0xff] %v327
    %361 = vst [vmem:[#allocation2 + $0xe0] sm:$0xff] %v256
    %362 = vst [vmem:[#allocation2 + $0xe8] sm:$0xff] %v258
    %363 = vst [vmem:[#allocation2 + $0xf0] sm:$0xff] %v329
    %364 = vst [vmem:[#allocation2 + $0xf8] sm:$0xff] %v331
    %v365 = vld [vmem:[#allocation7] sm:$0xff]
    %v366 = vld [vmem:[#allocation7 + $0x8] sm:$0xff]
    %v367 = vld [vmem:[#allocation7 + $0x10] sm:$0xff]
    %v368 = vld [vmem:[#allocation7 + $0x18] sm:$0xff]
    %v369 = vld [vmem:[#allocation7 + $0x20] sm:$0xff]
    %v370 = vld [vmem:[#allocation7 + $0x28] sm:$0xff]
    %v371 = vld [vmem:[#allocation7 + $0x30] sm:$0xff]
    %v372 = vld [vmem:[#allocation7 + $0x38] sm:$0xff]
    %v373 = vld [vmem:[#allocation7 + $0x40] sm:$0xff]
    %v374 = vld [vmem:[#allocation7 + $0x48] sm:$0xff]
    %v375 = vld [vmem:[#allocation7 + $0x50] sm:$0xff]
    %v376 = vld [vmem:[#allocation7 + $0x58] sm:$0xff]
    %v377 = vld [vmem:[#allocation7 + $0x60] sm:$0xff]
    %v378 = vld [vmem:[#allocation7 + $0x68] sm:$0xff]
    %v379 = vld [vmem:[#allocation7 + $0x70] sm:$0xff]
    %v380 = vld [vmem:[#allocation7 + $0x78] sm:$0xff]
    %v381 = vld [vmem:[#allocation7 + $0x80] sm:$0xff]
    %v382 = vld [vmem:[#allocation7 + $0x88] sm:$0xff]
    %v383 = vld [vmem:[#allocation7 + $0x90] sm:$0xff]
    %v384 = vld [vmem:[#allocation7 + $0x98] sm:$0xff]
    %v385 = vld [vmem:[#allocation7 + $0xa0] sm:$0xff]
    %v386 = vld [vmem:[#allocation7 + $0xa8] sm:$0xff]
    %v387 = vld [vmem:[#allocation7 + $0xb0] sm:$0xff]
    %v388 = vld [vmem:[#allocation7 + $0xb8] sm:$0xff]
    %v389 = vld [vmem:[#allocation7 + $0xc0] sm:$0xff]
    %v390 = vld [vmem:[#allocation7 + $0xc8] sm:$0xff]
    %v391 = vld [vmem:[#allocation7 + $0xd0] sm:$0xff]
    %v392 = vld [vmem:[#allocation7 + $0xd8] sm:$0xff]
    %v393 = vld [vmem:[#allocation7 + $0xe0] sm:$0xff]
    %v394 = vld [vmem:[#allocation7 + $0xe8] sm:$0xff]
    %v395 = vld [vmem:[#allocation7 + $0xf0] sm:$0xff]
    %v396 = vld [vmem:[#allocation7 + $0xf8] sm:$0xff]
    %v397 = vld [vmem:[%s1] sm:$0xff]
    %v398 = vld [vmem:[%s2] sm:$0xff]
    %s399 = smul.u32 0, 4
    %s400 = smul.addr %s399, 8
    %s401 = scalar_lea.vmem [#allocation2], %s400
    %v402 = vld [vmem:[%s401] sm:$0xff]
    %v403 = vld [vmem:[%s401 + $0x8] sm:$0xff]
    %v404 = vld [vmem:[%s401 + $0x10] sm:$0xff]
    %v405 = vld [vmem:[%s401 + $0x18] sm:$0xff]
    %v406 = vpack.c.bf16 %v397, %v397
    %v439 = vunpack.c.l.b16 %v365
    %v440 = vunpack.c.h.b16 %v365
    %v441 = vunpack.c.l.b16 %v366
    %v442 = vunpack.c.h.b16 %v366
    %v443 = vunpack.c.l.b16 %v367
    %v444 = vunpack.c.h.b16 %v367
    %v445 = vunpack.c.l.b16 %v368
    %v446 = vunpack.c.h.b16 %v368
    %v447 = vunpack.c.l.b16 %v369
    %v448 = vunpack.c.h.b16 %v369
    %v449 = vunpack.c.l.b16 %v370
    %v450 = vunpack.c.h.b16 %v370
    %v451 = vunpack.c.l.b16 %v371
    %v452 = vunpack.c.h.b16 %v371
    %v453 = vunpack.c.l.b16 %v372
    %v454 = vunpack.c.h.b16 %v372
    %v455 = vunpack.c.l.b16 %v373
    %v456 = vunpack.c.h.b16 %v373
    %v457 = vunpack.c.l.b16 %v374
    %v458 = vunpack.c.h.b16 %v374
    %v459 = vunpack.c.l.b16 %v375
    %v460 = vunpack.c.h.b16 %v375
    %v461 = vunpack.c.l.b16 %v376
    %v462 = vunpack.c.h.b16 %v376
    %v463 = vunpack.c.l.b16 %v377
    %v464 = vunpack.c.h.b16 %v377
    %v465 = vunpack.c.l.b16 %v378
    %v466 = vunpack.c.h.b16 %v378
    %v467 = vunpack.c.l.b16 %v379
    %v468 = vunpack.c.h.b16 %v379
    %v469 = vunpack.c.l.b16 %v380
    %v470 = vunpack.c.h.b16 %v380
    %v471 = vunpack.c.l.b16 %v381
    %v472 = vunpack.c.h.b16 %v381
    %v473 = vunpack.c.l.b16 %v382
    %v474 = vunpack.c.h.b16 %v382
    %v475 = vunpack.c.l.b16 %v383
    %v476 = vunpack.c.h.b16 %v383
    %v477 = vunpack.c.l.b16 %v384
    %v478 = vunpack.c.h.b16 %v384
    %v479 = vunpack.c.l.b16 %v385
    %v480 = vunpack.c.h.b16 %v385
    %v481 = vunpack.c.l.b16 %v386
    %v482 = vunpack.c.h.b16 %v386
    %v483 = vunpack.c.l.b16 %v387
    %v484 = vunpack.c.h.b16 %v387
    %v485 = vunpack.c.l.b16 %v388
    %v486 = vunpack.c.h.b16 %v388
    %v487 = vunpack.c.l.b16 %v389
    %v488 = vunpack.c.h.b16 %v389
    %v489 = vunpack.c.l.b16 %v390
    %v490 = vunpack.c.h.b16 %v390
    %v491 = vunpack.c.l.b16 %v391
    %v492 = vunpack.c.h.b16 %v391
    %v493 = vunpack.c.l.b16 %v392
    %v494 = vunpack.c.h.b16 %v392
    %v495 = vunpack.c.l.b16 %v393
    %v496 = vunpack.c.h.b16 %v393
    %v497 = vunpack.c.l.b16 %v394
    %v498 = vunpack.c.h.b16 %v394
    %v499 = vunpack.c.l.b16 %v395
    %v500 = vunpack.c.h.b16 %v395
    %v501 = vunpack.c.l.b16 %v396
    %v502 = vunpack.c.h.b16 %v396
    %v503 = vpack.c.b16 %v443, %v439
    %v504 = vpack.c.b16 %v444, %v440
    %v505 = vpack.c.b16 %v445, %v441
    %v506 = vpack.c.b16 %v446, %v442
    %v507 = vpack.c.b16 %v451, %v447
    %v508 = vpack.c.b16 %v452, %v448
    %v509 = vpack.c.b16 %v453, %v449
    %v510 = vpack.c.b16 %v454, %v450
    %v511 = vpack.c.b16 %v459, %v455
    %v512 = vpack.c.b16 %v460, %v456
    %v513 = vpack.c.b16 %v461, %v457
    %v514 = vpack.c.b16 %v462, %v458
    %v515 = vpack.c.b16 %v467, %v463
    %v516 = vpack.c.b16 %v468, %v464
    %v517 = vpack.c.b16 %v469, %v465
    %v518 = vpack.c.b16 %v470, %v466
    %v519 = vpack.c.b16 %v475, %v471
    %v520 = vpack.c.b16 %v476, %v472
    %v521 = vpack.c.b16 %v477, %v473
    %v522 = vpack.c.b16 %v478, %v474
    %v523 = vpack.c.b16 %v483, %v479
    %v524 = vpack.c.b16 %v484, %v480
    %v525 = vpack.c.b16 %v485, %v481
    %v526 = vpack.c.b16 %v486, %v482
    %v527 = vpack.c.b16 %v491, %v487
    %v528 = vpack.c.b16 %v492, %v488
    %v529 = vpack.c.b16 %v493, %v489
    %v530 = vpack.c.b16 %v494, %v490
    %v531 = vpack.c.b16 %v499, %v495
    %v532 = vpack.c.b16 %v500, %v496
    %v533 = vpack.c.b16 %v501, %v497
    %v534 = vpack.c.b16 %v502, %v498
    %567 = vmatprep.subr.bf16.mxu0 %v532
    %568 = vmatpush1.bf16.msra.mxu0 %v531
    %569 = vmatprep.subr.bf16.mxu0 %v528
    %570 = vmatpush1.bf16.msra.mxu0 %v527
    %571 = vmatprep.subr.bf16.mxu0 %v524
    %572 = vmatpush1.bf16.msra.mxu0 %v523
    %573 = vmatprep.subr.bf16.mxu0 %v520
    %574 = vmatpush1.bf16.msra.mxu0 %v519
    %575 = vmatprep.subr.bf16.mxu0 %v516
    %576 = vmatpush1.bf16.msra.mxu0 %v515
    %577 = vmatprep.subr.bf16.mxu0 %v512
    %578 = vmatpush1.bf16.msra.mxu0 %v511
    %579 = vmatprep.subr.bf16.mxu0 %v508
    %580 = vmatpush1.bf16.msra.mxu0 %v507
    %581 = vmatprep.subr.bf16.mxu0 %v504
    %582 = vmatpush1.bf16.msra.mxu0 %v503
    %583 = vmatprep.subr.bf16.mxu0 0
    %584 = vmatpush2.bf16.msra.mxu0 0
    %585 = vmatprep.subr.bf16.mxu0 0
    %586 = vmatpush2.bf16.msra.mxu0 0
    %587 = vmatprep.subr.bf16.mxu0 0
    %588 = vmatpush2.bf16.msra.mxu0 0
    %589 = vmatprep.subr.bf16.mxu0 0
    %590 = vmatpush2.bf16.msra.mxu0 0
    %591 = vmatprep.subr.bf16.mxu0 0
    %592 = vmatpush2.bf16.msra.mxu0 0
    %593 = vmatprep.subr.bf16.mxu0 0
    %594 = vmatpush2.bf16.msra.mxu0 0
    %595 = vmatprep.subr.bf16.mxu0 0
    %596 = vmatpush2.bf16.msra.mxu0 0
    %597 = vmatprep.subr.bf16.mxu0 0
    %598 = vmatpush2.bf16.msra.mxu0 0
    %599 = vmatprep.mubr.bf16.mxu0 0
    %600 = vmatmul.mubr.bf16.gmra.mxu0 %v406
    %v601 = vpop.f32.mrf.mxu0
    %v602 = vadd.f32 0.0, %v601
    %v603 = vpop.f32.mrf.mxu0
    %v604 = vadd.f32 0.0, %v603
    %v605 = vpop.f32.mrf.mxu0
    %v606 = vpop.f32.mrf.mxu0
    %607 = vdwg.mxu0
    %608 = vmatprep.subr.bf16.mxu0 %v534
    %609 = vmatpush1.bf16.msra.mxu0 %v533
    %610 = vmatprep.subr.bf16.mxu0 %v530
    %611 = vmatpush1.bf16.msra.mxu0 %v529
    %612 = vmatprep.subr.bf16.mxu0 %v526
    %613 = vmatpush1.bf16.msra.mxu0 %v525
    %614 = vmatprep.subr.bf16.mxu0 %v522
    %615 = vmatpush1.bf16.msra.mxu0 %v521
    %616 = vmatprep.subr.bf16.mxu0 %v518
    %617 = vmatpush1.bf16.msra.mxu0 %v517
    %618 = vmatprep.subr.bf16.mxu0 %v514
    %619 = vmatpush1.bf16.msra.mxu0 %v513
    %620 = vmatprep.subr.bf16.mxu0 %v510
    %621 = vmatpush1.bf16.msra.mxu0 %v509
    %622 = vmatprep.subr.bf16.mxu0 %v506
    %623 = vmatpush1.bf16.msra.mxu0 %v505
    %624 = vmatprep.subr.bf16.mxu0 0
    %625 = vmatpush2.bf16.msra.mxu0 0
    %626 = vmatprep.subr.bf16.mxu0 0
    %627 = vmatpush2.bf16.msra.mxu0 0
    %628 = vmatprep.subr.bf16.mxu0 0
    %629 = vmatpush2.bf16.msra.mxu0 0
    %630 = vmatprep.subr.bf16.mxu0 0
    %631 = vmatpush2.bf16.msra.mxu0 0
    %632 = vmatprep.subr.bf16.mxu0 0
    %633 = vmatpush2.bf16.msra.mxu0 0
    %634 = vmatprep.subr.bf16.mxu0 0
    %635 = vmatpush2.bf16.msra.mxu0 0
    %636 = vmatprep.subr.bf16.mxu0 0
    %637 = vmatpush2.bf16.msra.mxu0 0
    %638 = vmatprep.subr.bf16.mxu0 0
    %639 = vmatpush2.bf16.msra.mxu0 0
    %640 = vmatprep.mubr.bf16.mxu0 0
    %641 = vmatmul.mubr.bf16.gmra.mxu0 %v406
    %v642 = vpop.f32.mrf.mxu0
    %v643 = vadd.f32 0.0, %v642
    %v644 = vpop.f32.mrf.mxu0
    %v645 = vadd.f32 0.0, %v644
    %v646 = vpop.f32.mrf.mxu0
    %v647 = vpop.f32.mrf.mxu0
    %648 = vdwg.mxu0
    %v649 = vadd.f32 %v402, %v602
    %v650 = vadd.f32 %v403, %v604
    %v651 = vadd.f32 %v404, %v643
    %v652 = vadd.f32 %v405, %v645
    %v653 = vxor.u32 %v649, 2147483648
    %v654 = vmul.f32 %v653, 1.442695
    %v655 = vpow.pop %v654
    %v656 = vadd.f32 %v655, 1.0
    %v657 = vrcp.pop %v656
    %v658 = vmul.f32 1.0, %v657
    %v659 = vxor.u32 %v650, 2147483648
    %v660 = vmul.f32 %v659, 1.442695
    %v661 = vpow.pop %v660
    %v662 = vadd.f32 %v661, 1.0
    %v663 = vrcp.pop %v662
    %v664 = vmul.f32 1.0, %v663
    %v665 = vtanh.pop %v651
    %v666 = vxor.u32 %v652, 2147483648
    %v667 = vmul.f32 %v666, 1.442695
    %v668 = vpow.pop %v667
    %v669 = vadd.f32 %v668, 1.0
    %v670 = vrcp.pop %v669
    %v671 = vmul.f32 1.0, %v670
    %v672 = vmul.f32 %v664, %v398
    %v673 = vmul.f32 %v658, %v665
    %v674 = vadd.f32 %v672, %v673
    %v675 = vtanh.pop %v674
    %v676 = vmul.f32 %v671, %v675
    %677 = vst [vmem:[#allocation3] sm:$0xff] %v676
    %s678 = smul.u32 1, 4
    %s679 = smul.addr %s678, 8
    %s680 = scalar_lea.vmem [#allocation2], %s679
    %v681 = vld [vmem:[%s680] sm:$0xff]
    %v682 = vld [vmem:[%s680 + $0x8] sm:$0xff]
    %v683 = vld [vmem:[%s680 + $0x10] sm:$0xff]
    %v684 = vld [vmem:[%s680 + $0x18] sm:$0xff]
    %v685 = vpack.c.bf16 %v676, %v676
    %686 = vmatprep.subr.bf16.mxu0 %v532
    %687 = vmatpush1.bf16.msra.mxu0 %v531
    %688 = vmatprep.subr.bf16.mxu0 %v528
    %689 = vmatpush1.bf16.msra.mxu0 %v527
    %690 = vmatprep.subr.bf16.mxu0 %v524
    %691 = vmatpush1.bf16.msra.mxu0 %v523
    %692 = vmatprep.subr.bf16.mxu0 %v520
    %693 = vmatpush1.bf16.msra.mxu0 %v519
    %694 = vmatprep.subr.bf16.mxu0 %v516
    %695 = vmatpush1.bf16.msra.mxu0 %v515
    %696 = vmatprep.subr.bf16.mxu0 %v512
    %697 = vmatpush1.bf16.msra.mxu0 %v511
    %698 = vmatprep.subr.bf16.mxu0 %v508
    %699 = vmatpush1.bf16.msra.mxu0 %v507
    %700 = vmatprep.subr.bf16.mxu0 %v504
    %701 = vmatpush1.bf16.msra.mxu0 %v503
    %702 = vmatprep.subr.bf16.mxu0 0
    %703 = vmatpush2.bf16.msra.mxu0 0
    %704 = vmatprep.subr.bf16.mxu0 0
    %705 = vmatpush2.bf16.msra.mxu0 0
    %706 = vmatprep.subr.bf16.mxu0 0
    %707 = vmatpush2.bf16.msra.mxu0 0
    %708 = vmatprep.subr.bf16.mxu0 0
    %709 = vmatpush2.bf16.msra.mxu0 0
    %710 = vmatprep.subr.bf16.mxu0 0
    %711 = vmatpush2.bf16.msra.mxu0 0
    %712 = vmatprep.subr.bf16.mxu0 0
    %713 = vmatpush2.bf16.msra.mxu0 0
    %714 = vmatprep.subr.bf16.mxu0 0
    %715 = vmatpush2.bf16.msra.mxu0 0
    %716 = vmatprep.subr.bf16.mxu0 0
    %717 = vmatpush2.bf16.msra.mxu0 0
    %718 = vmatprep.mubr.bf16.mxu0 0
    %719 = vmatmul.mubr.bf16.gmra.mxu0 %v685
    %v720 = vpop.f32.mrf.mxu0
    %v721 = vadd.f32 0.0, %v720
    %v722 = vpop.f32.mrf.mxu0
    %v723 = vadd.f32 0.0, %v722
    %v724 = vpop.f32.mrf.mxu0
    %v725 = vpop.f32.mrf.mxu0
    %726 = vdwg.mxu0
    %727 = vmatprep.subr.bf16.mxu0 %v534
    %728 = vmatpush1.bf16.msra.mxu0 %v533
    %729 = vmatprep.subr.bf16.mxu0 %v530
    %730 = vmatpush1.bf16.msra.mxu0 %v529
    %731 = vmatprep.subr.bf16.mxu0 %v526
    %732 = vmatpush1.bf16.msra.mxu0 %v525
    %733 = vmatprep.subr.bf16.mxu0 %v522
    %734 = vmatpush1.bf16.msra.mxu0 %v521
    %735 = vmatprep.subr.bf16.mxu0 %v518
    %736 = vmatpush1.bf16.msra.mxu0 %v517
    %737 = vmatprep.subr.bf16.mxu0 %v514
    %738 = vmatpush1.bf16.msra.mxu0 %v513
    %739 = vmatprep.subr.bf16.mxu0 %v510
    %740 = vmatpush1.bf16.msra.mxu0 %v509
    %741 = vmatprep.subr.bf16.mxu0 %v506
    %742 = vmatpush1.bf16.msra.mxu0 %v505
    %743 = vmatprep.subr.bf16.mxu0 0
    %744 = vmatpush2.bf16.msra.mxu0 0
    %745 = vmatprep.subr.bf16.mxu0 0
    %746 = vmatpush2.bf16.msra.mxu0 0
    %747 = vmatprep.subr.bf16.mxu0 0
    %748 = vmatpush2.bf16.msra.mxu0 0
    %749 = vmatprep.subr.bf16.mxu0 0
    %750 = vmatpush2.bf16.msra.mxu0 0
    %751 = vmatprep.subr.bf16.mxu0 0
    %752 = vmatpush2.bf16.msra.mxu0 0
    %753 = vmatprep.subr.bf16.mxu0 0
    %754 = vmatpush2.bf16.msra.mxu0 0
    %755 = vmatprep.subr.bf16.mxu0 0
    %756 = vmatpush2.bf16.msra.mxu0 0
    %757 = vmatprep.subr.bf16.mxu0 0
    %758 = vmatpush2.bf16.msra.mxu0 0
    %759 = vmatprep.mubr.bf16.mxu0 0
    %760 = vmatmul.mubr.bf16.gmra.mxu0 %v685
    %v761 = vpop.f32.mrf.mxu0
    %v762 = vadd.f32 0.0, %v761
    %v763 = vpop.f32.mrf.mxu0
    %v764 = vadd.f32 0.0, %v763
    %v765 = vpop.f32.mrf.mxu0
    %v766 = vpop.f32.mrf.mxu0
    %767 = vdwg.mxu0
    %v768 = vadd.f32 %v681, %v721
    %v769 = vadd.f32 %v682, %v723
    %v770 = vadd.f32 %v683, %v762
    %v771 = vadd.f32 %v684, %v764
    %v772 = vxor.u32 %v768, 2147483648
    %v773 = vmul.f32 %v772, 1.442695
    %v774 = vpow.pop %v773
    %v775 = vadd.f32 %v774, 1.0
    %v776 = vrcp.pop %v775
    %v777 = vmul.f32 1.0, %v776
    %v778 = vxor.u32 %v769, 2147483648
    %v779 = vmul.f32 %v778, 1.442695
    %v780 = vpow.pop %v779
    %v781 = vadd.f32 %v780, 1.0
    %v782 = vrcp.pop %v781
    %v783 = vmul.f32 1.0, %v782
    %v784 = vtanh.pop %v770
    %v785 = vxor.u32 %v771, 2147483648
    %v786 = vmul.f32 %v785, 1.442695
    %v787 = vpow.pop %v786
    %v788 = vadd.f32 %v787, 1.0
    %v789 = vrcp.pop %v788
    %v790 = vmul.f32 1.0, %v789
    %v791 = vmul.f32 %v783, %v674
    %v792 = vmul.f32 %v777, %v784
    %v793 = vadd.f32 %v791, %v792
    %v794 = vtanh.pop %v793
    %v795 = vmul.f32 %v790, %v794
    %s796 = scalar_lea.vmem [#allocation3], 8
    %797 = vst [vmem:[%s796] sm:$0xff] %v795
    %s798 = smul.u32 2, 4
    %s799 = smul.addr %s798, 8
    %s800 = scalar_lea.vmem [#allocation2], %s799
    %v801 = vld [vmem:[%s800] sm:$0xff]
    %v802 = vld [vmem:[%s800 + $0x8] sm:$0xff]
    %v803 = vld [vmem:[%s800 + $0x10] sm:$0xff]
    %v804 = vld [vmem:[%s800 + $0x18] sm:$0xff]
    %v805 = vpack.c.bf16 %v795, %v795
    %806 = vmatprep.subr.bf16.mxu0 %v532
    %807 = vmatpush1.bf16.msra.mxu0 %v531
    %808 = vmatprep.subr.bf16.mxu0 %v528
    %809 = vmatpush1.bf16.msra.mxu0 %v527
    %810 = vmatprep.subr.bf16.mxu0 %v524
    %811 = vmatpush1.bf16.msra.mxu0 %v523
    %812 = vmatprep.subr.bf16.mxu0 %v520
    %813 = vmatpush1.bf16.msra.mxu0 %v519
    %814 = vmatprep.subr.bf16.mxu0 %v516
    %815 = vmatpush1.bf16.msra.mxu0 %v515
    %816 = vmatprep.subr.bf16.mxu0 %v512
    %817 = vmatpush1.bf16.msra.mxu0 %v511
    %818 = vmatprep.subr.bf16.mxu0 %v508
    %819 = vmatpush1.bf16.msra.mxu0 %v507
    %820 = vmatprep.subr.bf16.mxu0 %v504
    %821 = vmatpush1.bf16.msra.mxu0 %v503
    %822 = vmatprep.subr.bf16.mxu0 0
    %823 = vmatpush2.bf16.msra.mxu0 0
    %824 = vmatprep.subr.bf16.mxu0 0
    %825 = vmatpush2.bf16.msra.mxu0 0
    %826 = vmatprep.subr.bf16.mxu0 0
    %827 = vmatpush2.bf16.msra.mxu0 0
    %828 = vmatprep.subr.bf16.mxu0 0
    %829 = vmatpush2.bf16.msra.mxu0 0
    %830 = vmatprep.subr.bf16.mxu0 0
    %831 = vmatpush2.bf16.msra.mxu0 0
    %832 = vmatprep.subr.bf16.mxu0 0
    %833 = vmatpush2.bf16.msra.mxu0 0
    %834 = vmatprep.subr.bf16.mxu0 0
    %835 = vmatpush2.bf16.msra.mxu0 0
    %836 = vmatprep.subr.bf16.mxu0 0
    %837 = vmatpush2.bf16.msra.mxu0 0
    %838 = vmatprep.mubr.bf16.mxu0 0
    %839 = vmatmul.mubr.bf16.gmra.mxu0 %v805
    %v840 = vpop.f32.mrf.mxu0
    %v841 = vadd.f32 0.0, %v840
    %v842 = vpop.f32.mrf.mxu0
    %v843 = vadd.f32 0.0, %v842
    %v844 = vpop.f32.mrf.mxu0
    %v845 = vpop.f32.mrf.mxu0
    %846 = vdwg.mxu0
    %847 = vmatprep.subr.bf16.mxu0 %v534
    %848 = vmatpush1.bf16.msra.mxu0 %v533
    %849 = vmatprep.subr.bf16.mxu0 %v530
    %850 = vmatpush1.bf16.msra.mxu0 %v529
    %851 = vmatprep.subr.bf16.mxu0 %v526
    %852 = vmatpush1.bf16.msra.mxu0 %v525
    %853 = vmatprep.subr.bf16.mxu0 %v522
    %854 = vmatpush1.bf16.msra.mxu0 %v521
    %855 = vmatprep.subr.bf16.mxu0 %v518
    %856 = vmatpush1.bf16.msra.mxu0 %v517
    %857 = vmatprep.subr.bf16.mxu0 %v514
    %858 = vmatpush1.bf16.msra.mxu0 %v513
    %859 = vmatprep.subr.bf16.mxu0 %v510
    %860 = vmatpush1.bf16.msra.mxu0 %v509
    %861 = vmatprep.subr.bf16.mxu0 %v506
    %862 = vmatpush1.bf16.msra.mxu0 %v505
    %863 = vmatprep.subr.bf16.mxu0 0
    %864 = vmatpush2.bf16.msra.mxu0 0
    %865 = vmatprep.subr.bf16.mxu0 0
    %866 = vmatpush2.bf16.msra.mxu0 0
    %867 = vmatprep.subr.bf16.mxu0 0
    %868 = vmatpush2.bf16.msra.mxu0 0
    %869 = vmatprep.subr.bf16.mxu0 0
    %870 = vmatpush2.bf16.msra.mxu0 0
    %871 = vmatprep.subr.bf16.mxu0 0
    %872 = vmatpush2.bf16.msra.mxu0 0
    %873 = vmatprep.subr.bf16.mxu0 0
    %874 = vmatpush2.bf16.msra.mxu0 0
    %875 = vmatprep.subr.bf16.mxu0 0
    %876 = vmatpush2.bf16.msra.mxu0 0
    %877 = vmatprep.subr.bf16.mxu0 0
    %878 = vmatpush2.bf16.msra.mxu0 0
    %879 = vmatprep.mubr.bf16.mxu0 0
    %880 = vmatmul.mubr.bf16.gmra.mxu0 %v805
    %v881 = vpop.f32.mrf.mxu0
    %v882 = vadd.f32 0.0, %v881
    %v883 = vpop.f32.mrf.mxu0
    %v884 = vadd.f32 0.0, %v883
    %v885 = vpop.f32.mrf.mxu0
    %v886 = vpop.f32.mrf.mxu0
    %887 = vdwg.mxu0
    %v888 = vadd.f32 %v801, %v841
    %v889 = vadd.f32 %v802, %v843
    %v890 = vadd.f32 %v803, %v882
    %v891 = vadd.f32 %v804, %v884
    %v892 = vxor.u32 %v888, 2147483648
    %v893 = vmul.f32 %v892, 1.442695
    %v894 = vpow.pop %v893
    %v895 = vadd.f32 %v894, 1.0
    %v896 = vrcp.pop %v895
    %v897 = vmul.f32 1.0, %v896
    %v898 = vxor.u32 %v889, 2147483648
    %v899 = vmul.f32 %v898, 1.442695
    %v900 = vpow.pop %v899
    %v901 = vadd.f32 %v900, 1.0
    %v902 = vrcp.pop %v901
    %v903 = vmul.f32 1.0, %v902
    %v904 = vtanh.pop %v890
    %v905 = vxor.u32 %v891, 2147483648
    %v906 = vmul.f32 %v905, 1.442695
    %v907 = vpow.pop %v906
    %v908 = vadd.f32 %v907, 1.0
    %v909 = vrcp.pop %v908
    %v910 = vmul.f32 1.0, %v909
    %v911 = vmul.f32 %v903, %v793
    %v912 = vmul.f32 %v897, %v904
    %v913 = vadd.f32 %v911, %v912
    %v914 = vtanh.pop %v913
    %v915 = vmul.f32 %v910, %v914
    %s916 = scalar_lea.vmem [#allocation3], 16
    %917 = vst [vmem:[%s916] sm:$0xff] %v915
    %s918 = smul.u32 3, 4
    %s919 = smul.addr %s918, 8
    %s920 = scalar_lea.vmem [#allocation2], %s919
    %v921 = vld [vmem:[%s920] sm:$0xff]
    %v922 = vld [vmem:[%s920 + $0x8] sm:$0xff]
    %v923 = vld [vmem:[%s920 + $0x10] sm:$0xff]
    %v924 = vld [vmem:[%s920 + $0x18] sm:$0xff]
    %v925 = vpack.c.bf16 %v915, %v915
    %926 = vmatprep.subr.bf16.mxu0 %v532
    %927 = vmatpush1.bf16.msra.mxu0 %v531
    %928 = vmatprep.subr.bf16.mxu0 %v528
    %929 = vmatpush1.bf16.msra.mxu0 %v527
    %930 = vmatprep.subr.bf16.mxu0 %v524
    %931 = vmatpush1.bf16.msra.mxu0 %v523
    %932 = vmatprep.subr.bf16.mxu0 %v520
    %933 = vmatpush1.bf16.msra.mxu0 %v519
    %934 = vmatprep.subr.bf16.mxu0 %v516
    %935 = vmatpush1.bf16.msra.mxu0 %v515
    %936 = vmatprep.subr.bf16.mxu0 %v512
    %937 = vmatpush1.bf16.msra.mxu0 %v511
    %938 = vmatprep.subr.bf16.mxu0 %v508
    %939 = vmatpush1.bf16.msra.mxu0 %v507
    %940 = vmatprep.subr.bf16.mxu0 %v504
    %941 = vmatpush1.bf16.msra.mxu0 %v503
    %942 = vmatprep.subr.bf16.mxu0 0
    %943 = vmatpush2.bf16.msra.mxu0 0
    %944 = vmatprep.subr.bf16.mxu0 0
    %945 = vmatpush2.bf16.msra.mxu0 0
    %946 = vmatprep.subr.bf16.mxu0 0
    %947 = vmatpush2.bf16.msra.mxu0 0
    %948 = vmatprep.subr.bf16.mxu0 0
    %949 = vmatpush2.bf16.msra.mxu0 0
    %950 = vmatprep.subr.bf16.mxu0 0
    %951 = vmatpush2.bf16.msra.mxu0 0
    %952 = vmatprep.subr.bf16.mxu0 0
    %953 = vmatpush2.bf16.msra.mxu0 0
    %954 = vmatprep.subr.bf16.mxu0 0
    %955 = vmatpush2.bf16.msra.mxu0 0
    %956 = vmatprep.subr.bf16.mxu0 0
    %957 = vmatpush2.bf16.msra.mxu0 0
    %958 = vmatprep.mubr.bf16.mxu0 0
    %959 = vmatmul.mubr.bf16.gmra.mxu0 %v925
    %v960 = vpop.f32.mrf.mxu0
    %v961 = vadd.f32 0.0, %v960
    %v962 = vpop.f32.mrf.mxu0
    %v963 = vadd.f32 0.0, %v962
    %v964 = vpop.f32.mrf.mxu0
    %v965 = vpop.f32.mrf.mxu0
    %966 = vdwg.mxu0
    %967 = vmatprep.subr.bf16.mxu0 %v534
    %968 = vmatpush1.bf16.msra.mxu0 %v533
    %969 = vmatprep.subr.bf16.mxu0 %v530
    %970 = vmatpush1.bf16.msra.mxu0 %v529
    %971 = vmatprep.subr.bf16.mxu0 %v526
    %972 = vmatpush1.bf16.msra.mxu0 %v525
    %973 = vmatprep.subr.bf16.mxu0 %v522
    %974 = vmatpush1.bf16.msra.mxu0 %v521
    %975 = vmatprep.subr.bf16.mxu0 %v518
    %976 = vmatpush1.bf16.msra.mxu0 %v517
    %977 = vmatprep.subr.bf16.mxu0 %v514
    %978 = vmatpush1.bf16.msra.mxu0 %v513
    %979 = vmatprep.subr.bf16.mxu0 %v510
    %980 = vmatpush1.bf16.msra.mxu0 %v509
    %981 = vmatprep.subr.bf16.mxu0 %v506
    %982 = vmatpush1.bf16.msra.mxu0 %v505
    %983 = vmatprep.subr.bf16.mxu0 0
    %984 = vmatpush2.bf16.msra.mxu0 0
    %985 = vmatprep.subr.bf16.mxu0 0
    %986 = vmatpush2.bf16.msra.mxu0 0
    %987 = vmatprep.subr.bf16.mxu0 0
    %988 = vmatpush2.bf16.msra.mxu0 0
    %989 = vmatprep.subr.bf16.mxu0 0
    %990 = vmatpush2.bf16.msra.mxu0 0
    %991 = vmatprep.subr.bf16.mxu0 0
    %992 = vmatpush2.bf16.msra.mxu0 0
    %993 = vmatprep.subr.bf16.mxu0 0
    %994 = vmatpush2.bf16.msra.mxu0 0
    %995 = vmatprep.subr.bf16.mxu0 0
    %996 = vmatpush2.bf16.msra.mxu0 0
    %997 = vmatprep.subr.bf16.mxu0 0
    %998 = vmatpush2.bf16.msra.mxu0 0
    %999 = vmatprep.mubr.bf16.mxu0 0
    %1000 = vmatmul.mubr.bf16.gmra.mxu0 %v925
    %v1001 = vpop.f32.mrf.mxu0
    %v1002 = vadd.f32 0.0, %v1001
    %v1003 = vpop.f32.mrf.mxu0
    %v1004 = vadd.f32 0.0, %v1003
    %v1005 = vpop.f32.mrf.mxu0
    %v1006 = vpop.f32.mrf.mxu0
    %1007 = vdwg.mxu0
    %v1008 = vadd.f32 %v921, %v961
    %v1009 = vadd.f32 %v922, %v963
    %v1010 = vadd.f32 %v923, %v1002
    %v1011 = vadd.f32 %v924, %v1004
    %v1012 = vxor.u32 %v1008, 2147483648
    %v1013 = vmul.f32 %v1012, 1.442695
    %v1014 = vpow.pop %v1013
    %v1015 = vadd.f32 %v1014, 1.0
    %v1016 = vrcp.pop %v1015
    %v1017 = vmul.f32 1.0, %v1016
    %v1018 = vxor.u32 %v1009, 2147483648
    %v1019 = vmul.f32 %v1018, 1.442695
    %v1020 = vpow.pop %v1019
    %v1021 = vadd.f32 %v1020, 1.0
    %v1022 = vrcp.pop %v1021
    %v1023 = vmul.f32 1.0, %v1022
    %v1024 = vtanh.pop %v1010
    %v1025 = vxor.u32 %v1011, 2147483648
    %v1026 = vmul.f32 %v1025, 1.442695
    %v1027 = vpow.pop %v1026
    %v1028 = vadd.f32 %v1027, 1.0
    %v1029 = vrcp.pop %v1028
    %v1030 = vmul.f32 1.0, %v1029
    %v1031 = vmul.f32 %v1023, %v913
    %v1032 = vmul.f32 %v1017, %v1024
    %v1033 = vadd.f32 %v1031, %v1032
    %v1034 = vtanh.pop %v1033
    %v1035 = vmul.f32 %v1030, %v1034
    %s1036 = scalar_lea.vmem [#allocation3], 24
    %1037 = vst [vmem:[%s1036] sm:$0xff] %v1035
    %s1038 = smul.u32 4, 4
    %s1039 = smul.addr %s1038, 8
    %s1040 = scalar_lea.vmem [#allocation2], %s1039
    %v1041 = vld [vmem:[%s1040] sm:$0xff]
    %v1042 = vld [vmem:[%s1040 + $0x8] sm:$0xff]
    %v1043 = vld [vmem:[%s1040 + $0x10] sm:$0xff]
    %v1044 = vld [vmem:[%s1040 + $0x18] sm:$0xff]
    %v1045 = vpack.c.bf16 %v1035, %v1035
    %1046 = vmatprep.subr.bf16.mxu0 %v532
    %1047 = vmatpush1.bf16.msra.mxu0 %v531
    %1048 = vmatprep.subr.bf16.mxu0 %v528
    %1049 = vmatpush1.bf16.msra.mxu0 %v527
    %1050 = vmatprep.subr.bf16.mxu0 %v524
    %1051 = vmatpush1.bf16.msra.mxu0 %v523
    %1052 = vmatprep.subr.bf16.mxu0 %v520
    %1053 = vmatpush1.bf16.msra.mxu0 %v519
    %1054 = vmatprep.subr.bf16.mxu0 %v516
    %1055 = vmatpush1.bf16.msra.mxu0 %v515
    %1056 = vmatprep.subr.bf16.mxu0 %v512
    %1057 = vmatpush1.bf16.msra.mxu0 %v511
    %1058 = vmatprep.subr.bf16.mxu0 %v508
    %1059 = vmatpush1.bf16.msra.mxu0 %v507
    %1060 = vmatprep.subr.bf16.mxu0 %v504
    %1061 = vmatpush1.bf16.msra.mxu0 %v503
    %1062 = vmatprep.subr.bf16.mxu0 0
    %1063 = vmatpush2.bf16.msra.mxu0 0
    %1064 = vmatprep.subr.bf16.mxu0 0
    %1065 = vmatpush2.bf16.msra.mxu0 0
    %1066 = vmatprep.subr.bf16.mxu0 0
    %1067 = vmatpush2.bf16.msra.mxu0 0
    %1068 = vmatprep.subr.bf16.mxu0 0
    %1069 = vmatpush2.bf16.msra.mxu0 0
    %1070 = vmatprep.subr.bf16.mxu0 0
    %1071 = vmatpush2.bf16.msra.mxu0 0
    %1072 = vmatprep.subr.bf16.mxu0 0
    %1073 = vmatpush2.bf16.msra.mxu0 0
    %1074 = vmatprep.subr.bf16.mxu0 0
    %1075 = vmatpush2.bf16.msra.mxu0 0
    %1076 = vmatprep.subr.bf16.mxu0 0
    %1077 = vmatpush2.bf16.msra.mxu0 0
    %1078 = vmatprep.mubr.bf16.mxu0 0
    %1079 = vmatmul.mubr.bf16.gmra.mxu0 %v1045
    %v1080 = vpop.f32.mrf.mxu0
    %v1081 = vadd.f32 0.0, %v1080
    %v1082 = vpop.f32.mrf.mxu0
    %v1083 = vadd.f32 0.0, %v1082
    %v1084 = vpop.f32.mrf.mxu0
    %v1085 = vpop.f32.mrf.mxu0
    %1086 = vdwg.mxu0
    %1087 = vmatprep.subr.bf16.mxu0 %v534
    %1088 = vmatpush1.bf16.msra.mxu0 %v533
    %1089 = vmatprep.subr.bf16.mxu0 %v530
    %1090 = vmatpush1.bf16.msra.mxu0 %v529
    %1091 = vmatprep.subr.bf16.mxu0 %v526
    %1092 = vmatpush1.bf16.msra.mxu0 %v525
    %1093 = vmatprep.subr.bf16.mxu0 %v522
    %1094 = vmatpush1.bf16.msra.mxu0 %v521
    %1095 = vmatprep.subr.bf16.mxu0 %v518
    %1096 = vmatpush1.bf16.msra.mxu0 %v517
    %1097 = vmatprep.subr.bf16.mxu0 %v514
    %1098 = vmatpush1.bf16.msra.mxu0 %v513
    %1099 = vmatprep.subr.bf16.mxu0 %v510
    %1100 = vmatpush1.bf16.msra.mxu0 %v509
    %1101 = vmatprep.subr.bf16.mxu0 %v506
    %1102 = vmatpush1.bf16.msra.mxu0 %v505
    %1103 = vmatprep.subr.bf16.mxu0 0
    %1104 = vmatpush2.bf16.msra.mxu0 0
    %1105 = vmatprep.subr.bf16.mxu0 0
    %1106 = vmatpush2.bf16.msra.mxu0 0
    %1107 = vmatprep.subr.bf16.mxu0 0
    %1108 = vmatpush2.bf16.msra.mxu0 0
    %1109 = vmatprep.subr.bf16.mxu0 0
    %1110 = vmatpush2.bf16.msra.mxu0 0
    %1111 = vmatprep.subr.bf16.mxu0 0
    %1112 = vmatpush2.bf16.msra.mxu0 0
    %1113 = vmatprep.subr.bf16.mxu0 0
    %1114 = vmatpush2.bf16.msra.mxu0 0
    %1115 = vmatprep.subr.bf16.mxu0 0
    %1116 = vmatpush2.bf16.msra.mxu0 0
    %1117 = vmatprep.subr.bf16.mxu0 0
    %1118 = vmatpush2.bf16.msra.mxu0 0
    %1119 = vmatprep.mubr.bf16.mxu0 0
    %1120 = vmatmul.mubr.bf16.gmra.mxu0 %v1045
    %v1121 = vpop.f32.mrf.mxu0
    %v1122 = vadd.f32 0.0, %v1121
    %v1123 = vpop.f32.mrf.mxu0
    %v1124 = vadd.f32 0.0, %v1123
    %v1125 = vpop.f32.mrf.mxu0
    %v1126 = vpop.f32.mrf.mxu0
    %1127 = vdwg.mxu0
    %v1128 = vadd.f32 %v1041, %v1081
    %v1129 = vadd.f32 %v1042, %v1083
    %v1130 = vadd.f32 %v1043, %v1122
    %v1131 = vadd.f32 %v1044, %v1124
    %v1132 = vxor.u32 %v1128, 2147483648
    %v1133 = vmul.f32 %v1132, 1.442695
    %v1134 = vpow.pop %v1133
    %v1135 = vadd.f32 %v1134, 1.0
    %v1136 = vrcp.pop %v1135
    %v1137 = vmul.f32 1.0, %v1136
    %v1138 = vxor.u32 %v1129, 2147483648
    %v1139 = vmul.f32 %v1138, 1.442695
    %v1140 = vpow.pop %v1139
    %v1141 = vadd.f32 %v1140, 1.0
    %v1142 = vrcp.pop %v1141
    %v1143 = vmul.f32 1.0, %v1142
    %v1144 = vtanh.pop %v1130
    %v1145 = vxor.u32 %v1131, 2147483648
    %v1146 = vmul.f32 %v1145, 1.442695
    %v1147 = vpow.pop %v1146
    %v1148 = vadd.f32 %v1147, 1.0
    %v1149 = vrcp.pop %v1148
    %v1150 = vmul.f32 1.0, %v1149
    %v1151 = vmul.f32 %v1143, %v1033
    %v1152 = vmul.f32 %v1137, %v1144
    %v1153 = vadd.f32 %v1151, %v1152
    %v1154 = vtanh.pop %v1153
    %v1155 = vmul.f32 %v1150, %v1154
    %s1156 = scalar_lea.vmem [#allocation3], 32
    %1157 = vst [vmem:[%s1156] sm:$0xff] %v1155
    %s1158 = smul.u32 5, 4
    %s1159 = smul.addr %s1158, 8
    %s1160 = scalar_lea.vmem [#allocation2], %s1159
    %v1161 = vld [vmem:[%s1160] sm:$0xff]
    %v1162 = vld [vmem:[%s1160 + $0x8] sm:$0xff]
    %v1163 = vld [vmem:[%s1160 + $0x10] sm:$0xff]
    %v1164 = vld [vmem:[%s1160 + $0x18] sm:$0xff]
    %v1165 = vpack.c.bf16 %v1155, %v1155
    %1166 = vmatprep.subr.bf16.mxu0 %v532
    %1167 = vmatpush1.bf16.msra.mxu0 %v531
    %1168 = vmatprep.subr.bf16.mxu0 %v528
    %1169 = vmatpush1.bf16.msra.mxu0 %v527
    %1170 = vmatprep.subr.bf16.mxu0 %v524
    %1171 = vmatpush1.bf16.msra.mxu0 %v523
    %1172 = vmatprep.subr.bf16.mxu0 %v520
    %1173 = vmatpush1.bf16.msra.mxu0 %v519
    %1174 = vmatprep.subr.bf16.mxu0 %v516
    %1175 = vmatpush1.bf16.msra.mxu0 %v515
    %1176 = vmatprep.subr.bf16.mxu0 %v512
    %1177 = vmatpush1.bf16.msra.mxu0 %v511
    %1178 = vmatprep.subr.bf16.mxu0 %v508
    %1179 = vmatpush1.bf16.msra.mxu0 %v507
    %1180 = vmatprep.subr.bf16.mxu0 %v504
    %1181 = vmatpush1.bf16.msra.mxu0 %v503
    %1182 = vmatprep.subr.bf16.mxu0 0
    %1183 = vmatpush2.bf16.msra.mxu0 0
    %1184 = vmatprep.subr.bf16.mxu0 0
    %1185 = vmatpush2.bf16.msra.mxu0 0
    %1186 = vmatprep.subr.bf16.mxu0 0
    %1187 = vmatpush2.bf16.msra.mxu0 0
    %1188 = vmatprep.subr.bf16.mxu0 0
    %1189 = vmatpush2.bf16.msra.mxu0 0
    %1190 = vmatprep.subr.bf16.mxu0 0
    %1191 = vmatpush2.bf16.msra.mxu0 0
    %1192 = vmatprep.subr.bf16.mxu0 0
    %1193 = vmatpush2.bf16.msra.mxu0 0
    %1194 = vmatprep.subr.bf16.mxu0 0
    %1195 = vmatpush2.bf16.msra.mxu0 0
    %1196 = vmatprep.subr.bf16.mxu0 0
    %1197 = vmatpush2.bf16.msra.mxu0 0
    %1198 = vmatprep.mubr.bf16.mxu0 0
    %1199 = vmatmul.mubr.bf16.gmra.mxu0 %v1165
    %v1200 = vpop.f32.mrf.mxu0
    %v1201 = vadd.f32 0.0, %v1200
    %v1202 = vpop.f32.mrf.mxu0
    %v1203 = vadd.f32 0.0, %v1202
    %v1204 = vpop.f32.mrf.mxu0
    %v1205 = vpop.f32.mrf.mxu0
    %1206 = vdwg.mxu0
    %1207 = vmatprep.subr.bf16.mxu0 %v534
    %1208 = vmatpush1.bf16.msra.mxu0 %v533
    %1209 = vmatprep.subr.bf16.mxu0 %v530
    %1210 = vmatpush1.bf16.msra.mxu0 %v529
    %1211 = vmatprep.subr.bf16.mxu0 %v526
    %1212 = vmatpush1.bf16.msra.mxu0 %v525
    %1213 = vmatprep.subr.bf16.mxu0 %v522
    %1214 = vmatpush1.bf16.msra.mxu0 %v521
    %1215 = vmatprep.subr.bf16.mxu0 %v518
    %1216 = vmatpush1.bf16.msra.mxu0 %v517
    %1217 = vmatprep.subr.bf16.mxu0 %v514
    %1218 = vmatpush1.bf16.msra.mxu0 %v513
    %1219 = vmatprep.subr.bf16.mxu0 %v510
    %1220 = vmatpush1.bf16.msra.mxu0 %v509
    %1221 = vmatprep.subr.bf16.mxu0 %v506
    %1222 = vmatpush1.bf16.msra.mxu0 %v505
    %1223 = vmatprep.subr.bf16.mxu0 0
    %1224 = vmatpush2.bf16.msra.mxu0 0
    %1225 = vmatprep.subr.bf16.mxu0 0
    %1226 = vmatpush2.bf16.msra.mxu0 0
    %1227 = vmatprep.subr.bf16.mxu0 0
    %1228 = vmatpush2.bf16.msra.mxu0 0
    %1229 = vmatprep.subr.bf16.mxu0 0
    %1230 = vmatpush2.bf16.msra.mxu0 0
    %1231 = vmatprep.subr.bf16.mxu0 0
    %1232 = vmatpush2.bf16.msra.mxu0 0
    %1233 = vmatprep.subr.bf16.mxu0 0
    %1234 = vmatpush2.bf16.msra.mxu0 0
    %1235 = vmatprep.subr.bf16.mxu0 0
    %1236 = vmatpush2.bf16.msra.mxu0 0
    %1237 = vmatprep.subr.bf16.mxu0 0
    %1238 = vmatpush2.bf16.msra.mxu0 0
    %1239 = vmatprep.mubr.bf16.mxu0 0
    %1240 = vmatmul.mubr.bf16.gmra.mxu0 %v1165
    %v1241 = vpop.f32.mrf.mxu0
    %v1242 = vadd.f32 0.0, %v1241
    %v1243 = vpop.f32.mrf.mxu0
    %v1244 = vadd.f32 0.0, %v1243
    %v1245 = vpop.f32.mrf.mxu0
    %v1246 = vpop.f32.mrf.mxu0
    %1247 = vdwg.mxu0
    %v1248 = vadd.f32 %v1161, %v1201
    %v1249 = vadd.f32 %v1162, %v1203
    %v1250 = vadd.f32 %v1163, %v1242
    %v1251 = vadd.f32 %v1164, %v1244
    %v1252 = vxor.u32 %v1248, 2147483648
    %v1253 = vmul.f32 %v1252, 1.442695
    %v1254 = vpow.pop %v1253
    %v1255 = vadd.f32 %v1254, 1.0
    %v1256 = vrcp.pop %v1255
    %v1257 = vmul.f32 1.0, %v1256
    %v1258 = vxor.u32 %v1249, 2147483648
    %v1259 = vmul.f32 %v1258, 1.442695
    %v1260 = vpow.pop %v1259
    %v1261 = vadd.f32 %v1260, 1.0
    %v1262 = vrcp.pop %v1261
    %v1263 = vmul.f32 1.0, %v1262
    %v1264 = vtanh.pop %v1250
    %v1265 = vxor.u32 %v1251, 2147483648
    %v1266 = vmul.f32 %v1265, 1.442695
    %v1267 = vpow.pop %v1266
    %v1268 = vadd.f32 %v1267, 1.0
    %v1269 = vrcp.pop %v1268
    %v1270 = vmul.f32 1.0, %v1269
    %v1271 = vmul.f32 %v1263, %v1153
    %v1272 = vmul.f32 %v1257, %v1264
    %v1273 = vadd.f32 %v1271, %v1272
    %v1274 = vtanh.pop %v1273
    %v1275 = vmul.f32 %v1270, %v1274
    %s1276 = scalar_lea.vmem [#allocation3], 40
    %1277 = vst [vmem:[%s1276] sm:$0xff] %v1275
    %s1278 = smul.u32 6, 4
    %s1279 = smul.addr %s1278, 8
    %s1280 = scalar_lea.vmem [#allocation2], %s1279
    %v1281 = vld [vmem:[%s1280] sm:$0xff]
    %v1282 = vld [vmem:[%s1280 + $0x8] sm:$0xff]
    %v1283 = vld [vmem:[%s1280 + $0x10] sm:$0xff]
    %v1284 = vld [vmem:[%s1280 + $0x18] sm:$0xff]
    %v1285 = vpack.c.bf16 %v1275, %v1275
    %1286 = vmatprep.subr.bf16.mxu0 %v532
    %1287 = vmatpush1.bf16.msra.mxu0 %v531
    %1288 = vmatprep.subr.bf16.mxu0 %v528
    %1289 = vmatpush1.bf16.msra.mxu0 %v527
    %1290 = vmatprep.subr.bf16.mxu0 %v524
    %1291 = vmatpush1.bf16.msra.mxu0 %v523
    %1292 = vmatprep.subr.bf16.mxu0 %v520
    %1293 = vmatpush1.bf16.msra.mxu0 %v519
    %1294 = vmatprep.subr.bf16.mxu0 %v516
    %1295 = vmatpush1.bf16.msra.mxu0 %v515
    %1296 = vmatprep.subr.bf16.mxu0 %v512
    %1297 = vmatpush1.bf16.msra.mxu0 %v511
    %1298 = vmatprep.subr.bf16.mxu0 %v508
    %1299 = vmatpush1.bf16.msra.mxu0 %v507
    %1300 = vmatprep.subr.bf16.mxu0 %v504
    %1301 = vmatpush1.bf16.msra.mxu0 %v503
    %1302 = vmatprep.subr.bf16.mxu0 0
    %1303 = vmatpush2.bf16.msra.mxu0 0
    %1304 = vmatprep.subr.bf16.mxu0 0
    %1305 = vmatpush2.bf16.msra.mxu0 0
    %1306 = vmatprep.subr.bf16.mxu0 0
    %1307 = vmatpush2.bf16.msra.mxu0 0
    %1308 = vmatprep.subr.bf16.mxu0 0
    %1309 = vmatpush2.bf16.msra.mxu0 0
    %1310 = vmatprep.subr.bf16.mxu0 0
    %1311 = vmatpush2.bf16.msra.mxu0 0
    %1312 = vmatprep.subr.bf16.mxu0 0
    %1313 = vmatpush2.bf16.msra.mxu0 0
    %1314 = vmatprep.subr.bf16.mxu0 0
    %1315 = vmatpush2.bf16.msra.mxu0 0
    %1316 = vmatprep.subr.bf16.mxu0 0
    %1317 = vmatpush2.bf16.msra.mxu0 0
    %1318 = vmatprep.mubr.bf16.mxu0 0
    %1319 = vmatmul.mubr.bf16.gmra.mxu0 %v1285
    %v1320 = vpop.f32.mrf.mxu0
    %v1321 = vadd.f32 0.0, %v1320
    %v1322 = vpop.f32.mrf.mxu0
    %v1323 = vadd.f32 0.0, %v1322
    %v1324 = vpop.f32.mrf.mxu0
    %v1325 = vpop.f32.mrf.mxu0
    %1326 = vdwg.mxu0
    %1327 = vmatprep.subr.bf16.mxu0 %v534
    %1328 = vmatpush1.bf16.msra.mxu0 %v533
    %1329 = vmatprep.subr.bf16.mxu0 %v530
    %1330 = vmatpush1.bf16.msra.mxu0 %v529
    %1331 = vmatprep.subr.bf16.mxu0 %v526
    %1332 = vmatpush1.bf16.msra.mxu0 %v525
    %1333 = vmatprep.subr.bf16.mxu0 %v522
    %1334 = vmatpush1.bf16.msra.mxu0 %v521
    %1335 = vmatprep.subr.bf16.mxu0 %v518
    %1336 = vmatpush1.bf16.msra.mxu0 %v517
    %1337 = vmatprep.subr.bf16.mxu0 %v514
    %1338 = vmatpush1.bf16.msra.mxu0 %v513
    %1339 = vmatprep.subr.bf16.mxu0 %v510
    %1340 = vmatpush1.bf16.msra.mxu0 %v509
    %1341 = vmatprep.subr.bf16.mxu0 %v506
    %1342 = vmatpush1.bf16.msra.mxu0 %v505
    %1343 = vmatprep.subr.bf16.mxu0 0
    %1344 = vmatpush2.bf16.msra.mxu0 0
    %1345 = vmatprep.subr.bf16.mxu0 0
    %1346 = vmatpush2.bf16.msra.mxu0 0
    %1347 = vmatprep.subr.bf16.mxu0 0
    %1348 = vmatpush2.bf16.msra.mxu0 0
    %1349 = vmatprep.subr.bf16.mxu0 0
    %1350 = vmatpush2.bf16.msra.mxu0 0
    %1351 = vmatprep.subr.bf16.mxu0 0
    %1352 = vmatpush2.bf16.msra.mxu0 0
    %1353 = vmatprep.subr.bf16.mxu0 0
    %1354 = vmatpush2.bf16.msra.mxu0 0
    %1355 = vmatprep.subr.bf16.mxu0 0
    %1356 = vmatpush2.bf16.msra.mxu0 0
    %1357 = vmatprep.subr.bf16.mxu0 0
    %1358 = vmatpush2.bf16.msra.mxu0 0
    %1359 = vmatprep.mubr.bf16.mxu0 0
    %1360 = vmatmul.mubr.bf16.gmra.mxu0 %v1285
    %v1361 = vpop.f32.mrf.mxu0
    %v1362 = vadd.f32 0.0, %v1361
    %v1363 = vpop.f32.mrf.mxu0
    %v1364 = vadd.f32 0.0, %v1363
    %v1365 = vpop.f32.mrf.mxu0
    %v1366 = vpop.f32.mrf.mxu0
    %1367 = vdwg.mxu0
    %v1368 = vadd.f32 %v1281, %v1321
    %v1369 = vadd.f32 %v1282, %v1323
    %v1370 = vadd.f32 %v1283, %v1362
    %v1371 = vadd.f32 %v1284, %v1364
    %v1372 = vxor.u32 %v1368, 2147483648
    %v1373 = vmul.f32 %v1372, 1.442695
    %v1374 = vpow.pop %v1373
    %v1375 = vadd.f32 %v1374, 1.0
    %v1376 = vrcp.pop %v1375
    %v1377 = vmul.f32 1.0, %v1376
    %v1378 = vxor.u32 %v1369, 2147483648
    %v1379 = vmul.f32 %v1378, 1.442695
    %v1380 = vpow.pop %v1379
    %v1381 = vadd.f32 %v1380, 1.0
    %v1382 = vrcp.pop %v1381
    %v1383 = vmul.f32 1.0, %v1382
    %v1384 = vtanh.pop %v1370
    %v1385 = vxor.u32 %v1371, 2147483648
    %v1386 = vmul.f32 %v1385, 1.442695
    %v1387 = vpow.pop %v1386
    %v1388 = vadd.f32 %v1387, 1.0
    %v1389 = vrcp.pop %v1388
    %v1390 = vmul.f32 1.0, %v1389
    %v1391 = vmul.f32 %v1383, %v1273
    %v1392 = vmul.f32 %v1377, %v1384
    %v1393 = vadd.f32 %v1391, %v1392
    %v1394 = vtanh.pop %v1393
    %v1395 = vmul.f32 %v1390, %v1394
    %s1396 = scalar_lea.vmem [#allocation3], 48
    %1397 = vst [vmem:[%s1396] sm:$0xff] %v1395
    %s1398 = smul.u32 7, 4
    %s1399 = smul.addr %s1398, 8
    %s1400 = scalar_lea.vmem [#allocation2], %s1399
    %v1401 = vld [vmem:[%s1400] sm:$0xff]
    %v1402 = vld [vmem:[%s1400 + $0x8] sm:$0xff]
    %v1403 = vld [vmem:[%s1400 + $0x10] sm:$0xff]
    %v1404 = vld [vmem:[%s1400 + $0x18] sm:$0xff]
    %v1405 = vpack.c.bf16 %v1395, %v1395
    %1406 = vmatprep.subr.bf16.mxu0 %v532
    %1407 = vmatpush1.bf16.msra.mxu0 %v531
    %1408 = vmatprep.subr.bf16.mxu0 %v528
    %1409 = vmatpush1.bf16.msra.mxu0 %v527
    %1410 = vmatprep.subr.bf16.mxu0 %v524
    %1411 = vmatpush1.bf16.msra.mxu0 %v523
    %1412 = vmatprep.subr.bf16.mxu0 %v520
    %1413 = vmatpush1.bf16.msra.mxu0 %v519
    %1414 = vmatprep.subr.bf16.mxu0 %v516
    %1415 = vmatpush1.bf16.msra.mxu0 %v515
    %1416 = vmatprep.subr.bf16.mxu0 %v512
    %1417 = vmatpush1.bf16.msra.mxu0 %v511
    %1418 = vmatprep.subr.bf16.mxu0 %v508
    %1419 = vmatpush1.bf16.msra.mxu0 %v507
    %1420 = vmatprep.subr.bf16.mxu0 %v504
    %1421 = vmatpush1.bf16.msra.mxu0 %v503
    %1422 = vmatprep.subr.bf16.mxu0 0
    %1423 = vmatpush2.bf16.msra.mxu0 0
    %1424 = vmatprep.subr.bf16.mxu0 0
    %1425 = vmatpush2.bf16.msra.mxu0 0
    %1426 = vmatprep.subr.bf16.mxu0 0
    %1427 = vmatpush2.bf16.msra.mxu0 0
    %1428 = vmatprep.subr.bf16.mxu0 0
    %1429 = vmatpush2.bf16.msra.mxu0 0
    %1430 = vmatprep.subr.bf16.mxu0 0
    %1431 = vmatpush2.bf16.msra.mxu0 0
    %1432 = vmatprep.subr.bf16.mxu0 0
    %1433 = vmatpush2.bf16.msra.mxu0 0
    %1434 = vmatprep.subr.bf16.mxu0 0
    %1435 = vmatpush2.bf16.msra.mxu0 0
    %1436 = vmatprep.subr.bf16.mxu0 0
    %1437 = vmatpush2.bf16.msra.mxu0 0
    %1438 = vmatprep.mubr.bf16.mxu0 0
    %1439 = vmatmul.mubr.bf16.gmra.mxu0 %v1405
    %v1440 = vpop.f32.mrf.mxu0
    %v1441 = vadd.f32 0.0, %v1440
    %v1442 = vpop.f32.mrf.mxu0
    %v1443 = vadd.f32 0.0, %v1442
    %v1444 = vpop.f32.mrf.mxu0
    %v1445 = vpop.f32.mrf.mxu0
    %1446 = vdwg.mxu0
    %1447 = vmatprep.subr.bf16.mxu0 %v534
    %1448 = vmatpush1.bf16.msra.mxu0 %v533
    %1449 = vmatprep.subr.bf16.mxu0 %v530
    %1450 = vmatpush1.bf16.msra.mxu0 %v529
    %1451 = vmatprep.subr.bf16.mxu0 %v526
    %1452 = vmatpush1.bf16.msra.mxu0 %v525
    %1453 = vmatprep.subr.bf16.mxu0 %v522
    %1454 = vmatpush1.bf16.msra.mxu0 %v521
    %1455 = vmatprep.subr.bf16.mxu0 %v518
    %1456 = vmatpush1.bf16.msra.mxu0 %v517
    %1457 = vmatprep.subr.bf16.mxu0 %v514
    %1458 = vmatpush1.bf16.msra.mxu0 %v513
    %1459 = vmatprep.subr.bf16.mxu0 %v510
    %1460 = vmatpush1.bf16.msra.mxu0 %v509
    %1461 = vmatprep.subr.bf16.mxu0 %v506
    %1462 = vmatpush1.bf16.msra.mxu0 %v505
    %1463 = vmatprep.subr.bf16.mxu0 0
    %1464 = vmatpush2.bf16.msra.mxu0 0
    %1465 = vmatprep.subr.bf16.mxu0 0
    %1466 = vmatpush2.bf16.msra.mxu0 0
    %1467 = vmatprep.subr.bf16.mxu0 0
    %1468 = vmatpush2.bf16.msra.mxu0 0
    %1469 = vmatprep.subr.bf16.mxu0 0
    %1470 = vmatpush2.bf16.msra.mxu0 0
    %1471 = vmatprep.subr.bf16.mxu0 0
    %1472 = vmatpush2.bf16.msra.mxu0 0
    %1473 = vmatprep.subr.bf16.mxu0 0
    %1474 = vmatpush2.bf16.msra.mxu0 0
    %1475 = vmatprep.subr.bf16.mxu0 0
    %1476 = vmatpush2.bf16.msra.mxu0 0
    %1477 = vmatprep.subr.bf16.mxu0 0
    %1478 = vmatpush2.bf16.msra.mxu0 0
    %1479 = vmatprep.mubr.bf16.mxu0 0
    %1480 = vmatmul.mubr.bf16.gmra.mxu0 %v1405
    %v1481 = vpop.f32.mrf.mxu0
    %v1482 = vadd.f32 0.0, %v1481
    %v1483 = vpop.f32.mrf.mxu0
    %v1484 = vadd.f32 0.0, %v1483
    %v1485 = vpop.f32.mrf.mxu0
    %v1486 = vpop.f32.mrf.mxu0
    %1487 = vdwg.mxu0
    %v1488 = vadd.f32 %v1401, %v1441
    %v1489 = vadd.f32 %v1402, %v1443
    %v1490 = vadd.f32 %v1403, %v1482
    %v1491 = vadd.f32 %v1404, %v1484
    %v1492 = vxor.u32 %v1488, 2147483648
    %v1493 = vmul.f32 %v1492, 1.442695
    %v1494 = vpow.pop %v1493
    %v1495 = vadd.f32 %v1494, 1.0
    %v1496 = vrcp.pop %v1495
    %v1497 = vmul.f32 1.0, %v1496
    %v1498 = vxor.u32 %v1489, 2147483648
    %v1499 = vmul.f32 %v1498, 1.442695
    %v1500 = vpow.pop %v1499
    %v1501 = vadd.f32 %v1500, 1.0
    %v1502 = vrcp.pop %v1501
    %v1503 = vmul.f32 1.0, %v1502
    %v1504 = vtanh.pop %v1490
    %v1505 = vxor.u32 %v1491, 2147483648
    %v1506 = vmul.f32 %v1505, 1.442695
    %v1507 = vpow.pop %v1506
    %v1508 = vadd.f32 %v1507, 1.0
    %v1509 = vrcp.pop %v1508
    %v1510 = vmul.f32 1.0, %v1509
    %v1511 = vmul.f32 %v1503, %v1393
    %v1512 = vmul.f32 %v1497, %v1504
    %v1513 = vadd.f32 %v1511, %v1512
    %v1514 = vtanh.pop %v1513
    %v1515 = vmul.f32 %v1510, %v1514
    %s1516 = scalar_lea.vmem [#allocation3], 56
    %1517 = vst [vmem:[%s1516] sm:$0xff] %v1515
    %1518 = vst [vmem:[#allocation11] sm:$0xff] %v1515
    %1519 = vst [vmem:[#allocation13] sm:$0xff] %v1513
    %v1520 = vld [vmem:[#allocation3] sm:$0xff]
    %v1521 = vld [vmem:[#allocation3 + $0x8] sm:$0xff]
    %v1522 = vld [vmem:[#allocation3 + $0x10] sm:$0xff]
    %v1523 = vld [vmem:[#allocation3 + $0x18] sm:$0xff]
    %v1524 = vld [vmem:[#allocation3 + $0x20] sm:$0xff]
    %v1525 = vld [vmem:[#allocation3 + $0x28] sm:$0xff]
    %v1526 = vld [vmem:[#allocation3 + $0x30] sm:$0xff]
    %v1527 = vld [vmem:[#allocation3 + $0x38] sm:$0xff]
    %v1528 = vpack.c.bf16 %v1521, %v1520
    %v1529 = vpack.c.bf16 %v1523, %v1522
    %v1530 = vpack.c.bf16 %v1525, %v1524
    %v1531 = vpack.c.bf16 %v1527, %v1526
    %v1532 = vld [vmem:[#allocation9] sm:$0xf]
    %v1533 = vld [vmem:[#allocation9 + $0x4] sm:$0xf]
    %v1534 = vld [vmem:[#allocation9 + $0x8] sm:$0xf]
    %v1535 = vld [vmem:[#allocation9 + $0xc] sm:$0xf]
    %v1536 = vld [vmem:[#allocation9 + $0x10] sm:$0xf]
    %v1537 = vld [vmem:[#allocation9 + $0x14] sm:$0xf]
    %v1538 = vld [vmem:[#allocation9 + $0x18] sm:$0xf]
    %v1539 = vld [vmem:[#allocation9 + $0x1c] sm:$0xf]
    %v1540 = vld [vmem:[#allocation9 + $0x20] sm:$0xf]
    %v1541 = vld [vmem:[#allocation9 + $0x24] sm:$0xf]
    %v1542 = vld [vmem:[#allocation9 + $0x28] sm:$0xf]
    %v1543 = vld [vmem:[#allocation9 + $0x2c] sm:$0xf]
    %v1544 = vld [vmem:[#allocation9 + $0x30] sm:$0xf]
    %v1545 = vld [vmem:[#allocation9 + $0x34] sm:$0xf]
    %v1546 = vld [vmem:[#allocation9 + $0x38] sm:$0xf]
    %v1547 = vld [vmem:[#allocation9 + $0x3c] sm:$0xf]
    %v1548 = vld [vmem:[%s7] sm:$0x1]
    %v1550 = vlaneseq
    %v1551 = vshrl.u32 %v1550, 7
    %v1552 = vsub.s32 0, %v1551
    %v1553 = vrot.slane %v1548, %v1552
    %v1571 = vunpack.c.l.b16 %v1532
    %v1572 = vunpack.c.l.b16 %v1533
    %v1573 = vunpack.c.l.b16 %v1534
    %v1574 = vunpack.c.l.b16 %v1535
    %v1575 = vunpack.c.l.b16 %v1536
    %v1576 = vunpack.c.l.b16 %v1537
    %v1577 = vunpack.c.l.b16 %v1538
    %v1578 = vunpack.c.l.b16 %v1539
    %v1579 = vunpack.c.l.b16 %v1540
    %v1580 = vunpack.c.l.b16 %v1541
    %v1581 = vunpack.c.l.b16 %v1542
    %v1582 = vunpack.c.l.b16 %v1543
    %v1583 = vunpack.c.l.b16 %v1544
    %v1584 = vunpack.c.l.b16 %v1545
    %v1585 = vunpack.c.l.b16 %v1546
    %v1586 = vunpack.c.l.b16 %v1547
    %v1587 = vpack.c.b16 %v1572, %v1571
    %v1588 = vpack.c.b16 %v1574, %v1573
    %v1589 = vpack.c.b16 %v1576, %v1575
    %v1590 = vpack.c.b16 %v1578, %v1577
    %v1591 = vpack.c.b16 %v1580, %v1579
    %v1592 = vpack.c.b16 %v1582, %v1581
    %v1593 = vpack.c.b16 %v1584, %v1583
    %v1594 = vpack.c.b16 %v1586, %v1585
    %1603 = vmatprep.subr.bf16.mxu0 0
    %1604 = vmatpush1.bf16.msra.mxu0 %v1594
    %1605 = vmatprep.subr.bf16.mxu0 0
    %1606 = vmatpush1.bf16.msra.mxu0 %v1593
    %1607 = vmatprep.subr.bf16.mxu0 0
    %1608 = vmatpush1.bf16.msra.mxu0 %v1592
    %1609 = vmatprep.subr.bf16.mxu0 0
    %1610 = vmatpush1.bf16.msra.mxu0 %v1591
    %1611 = vmatprep.subr.bf16.mxu0 0
    %1612 = vmatpush1.bf16.msra.mxu0 %v1590
    %1613 = vmatprep.subr.bf16.mxu0 0
    %1614 = vmatpush1.bf16.msra.mxu0 %v1589
    %1615 = vmatprep.subr.bf16.mxu0 0
    %1616 = vmatpush1.bf16.msra.mxu0 %v1588
    %1617 = vmatprep.subr.bf16.mxu0 0
    %1618 = vmatpush1.bf16.msra.mxu0 %v1587
    %1619 = vmatprep.subr.bf16.mxu0 0
    %1620 = vmatpush2.bf16.msra.mxu0 0
    %1621 = vmatprep.subr.bf16.mxu0 0
    %1622 = vmatpush2.bf16.msra.mxu0 0
    %1623 = vmatprep.subr.bf16.mxu0 0
    %1624 = vmatpush2.bf16.msra.mxu0 0
    %1625 = vmatprep.subr.bf16.mxu0 0
    %1626 = vmatpush2.bf16.msra.mxu0 0
    %1627 = vmatprep.subr.bf16.mxu0 0
    %1628 = vmatpush2.bf16.msra.mxu0 0
    %1629 = vmatprep.subr.bf16.mxu0 0
    %1630 = vmatpush2.bf16.msra.mxu0 0
    %1631 = vmatprep.subr.bf16.mxu0 0
    %1632 = vmatpush2.bf16.msra.mxu0 0
    %1633 = vmatprep.subr.bf16.mxu0 0
    %1634 = vmatpush2.bf16.msra.mxu0 0
    %1635 = vmatprep.mubr.bf16.mxu0 0
    %1636 = vmatmul.mubr.bf16.gmra.mxu0 %v1528
    %v1637 = vpop.f32.mrf.mxu0
    %v1638 = vadd.f32 %v1553, %v1637
    %v1639 = vpop.f32.mrf.mxu0
    %v1640 = vpop.f32.mrf.mxu0
    %v1641 = vadd.f32 %v1553, %v1640
    %v1642 = vpop.f32.mrf.mxu0
    %1643 = vmatprep.mubr.bf16.mxu0 0
    %1644 = vmatmul.mubr.bf16.gmra.mxu0 %v1529
    %v1645 = vpop.f32.mrf.mxu0
    %v1646 = vadd.f32 %v1553, %v1645
    %v1647 = vpop.f32.mrf.mxu0
    %v1648 = vpop.f32.mrf.mxu0
    %v1649 = vadd.f32 %v1553, %v1648
    %v1650 = vpop.f32.mrf.mxu0
    %1651 = vmatprep.mubr.bf16.mxu0 0
    %1652 = vmatmul.mubr.bf16.gmra.mxu0 %v1530
    %v1653 = vpop.f32.mrf.mxu0
    %v1654 = vadd.f32 %v1553, %v1653
    %v1655 = vpop.f32.mrf.mxu0
    %v1656 = vpop.f32.mrf.mxu0
    %v1657 = vadd.f32 %v1553, %v1656
    %v1658 = vpop.f32.mrf.mxu0
    %1659 = vmatprep.mubr.bf16.mxu0 0
    %1660 = vmatmul.mubr.bf16.gmra.mxu0 %v1531
    %v1661 = vpop.f32.mrf.mxu0
    %v1662 = vadd.f32 %v1553, %v1661
    %v1663 = vpop.f32.mrf.mxu0
    %v1664 = vpop.f32.mrf.mxu0
    %v1665 = vadd.f32 %v1553, %v1664
    %v1666 = vpop.f32.mrf.mxu0
    %1667 = vdwg.mxu0
    %1668 = vst [vmem:[#allocation10] sm:$0xff] %v1638
    %1669 = vst [vmem:[#allocation10 + $0x8] sm:$0xff] %v1641
    %1670 = vst [vmem:[#allocation10 + $0x10] sm:$0xff] %v1646
    %1671 = vst [vmem:[#allocation10 + $0x18] sm:$0xff] %v1649
    %1672 = vst [vmem:[#allocation10 + $0x20] sm:$0xff] %v1654
    %1673 = vst [vmem:[#allocation10 + $0x28] sm:$0xff] %v1657
    %1674 = vst [vmem:[#allocation10 + $0x30] sm:$0xff] %v1662
    %1675 = vst [vmem:[#allocation10 + $0x38] sm:$0xff] %v1665
    // Predicated region
    $region46: #{tpu_custom_call.1} parent=1 // pred_check
      _
    $region47: #{tpu_custom_call.1} parent=1 // pred_check_branch
      %1677 = sbr.rel (0) target = $region49
    $region48: #{tpu_custom_call.1} parent=1 // pred_region
      %s1679 = ssub.s32 1024, 1024
      %1680 = vsyncadd [#allocation6], %s1679
      %s1681 = sshll.u32 [#allocation10], 4
      %s1682 = int_to_ptr.vmem [resolvable:$true] %s1681
      %1687 = dma.vmem_to_hbm [thread:$0]  %s1682, 1024, %s8, [#allocation6], 128, 128, 8
    $region49: #{tpu_custom_call.1} parent=1 // pred_fallthru
      _
    // Predicated region
    $region50: #{tpu_custom_call.1} parent=1 // pred_check
      _
    $region51: #{tpu_custom_call.1} parent=1 // pred_check_branch
      %1689 = sbr.rel (0) target = $region53
    $region52: #{tpu_custom_call.1} parent=1 // pred_region
      %s1691 = ssub.s32 128, 128
      %1692 = vsyncadd [#allocation12], %s1691
      %s1694 = sshll.u32 [#allocation11], 4
      %s1695 = int_to_ptr.vmem [resolvable:$true] %s1694
      %1697 = dma.vmem_to_hbm [thread:$0]  %s1695, 128, %s9, [#allocation12]
    $region53: #{tpu_custom_call.1} parent=1 // pred_fallthru
      _
    // Predicated region
    $region54: #{tpu_custom_call.1} parent=1 // pred_check
      _
    $region55: #{tpu_custom_call.1} parent=1 // pred_check_branch
      %1699 = sbr.rel (0) target = $region57
    $region56: #{tpu_custom_call.1} parent=1 // pred_region
      %s1701 = ssub.s32 128, 128
      %1702 = vsyncadd [#allocation12], %s1701
      %s1704 = sshll.u32 [#allocation13], 4
      %s1705 = int_to_ptr.vmem [resolvable:$true] %s1704
      %1707 = dma.vmem_to_hbm [thread:$0]  %s1705, 128, %s10, [#allocation12]
    $region57: #{tpu_custom_call.1} parent=1 // pred_fallthru
      _
    // Predicated region
    $region58: #{tpu_custom_call.1} parent=1 // pred_check
      _
    $region59: #{tpu_custom_call.1} parent=1 // pred_check_branch
      %1709 = sbr.rel (0) target = $region61
    $region60: #{tpu_custom_call.1} parent=1 // pred_region
      %1710 = dma.done [#allocation6], 1024
    $region61: #{tpu_custom_call.1} parent=1 // pred_fallthru
      _
    // Predicated region
    $region62: #{tpu_custom_call.1} parent=1 // pred_check
      _
    $region63: #{tpu_custom_call.1} parent=1 // pred_check_branch
      %1712 = sbr.rel (0) target = $region65
    $region64: #{tpu_custom_call.1} parent=1 // pred_region
      %1713 = dma.done [#allocation12], 128
    $region65: #{tpu_custom_call.1} parent=1 // pred_fallthru
      _
    // Predicated region
    $region66: #{tpu_custom_call.1} parent=1 // pred_check
      _
    $region67: #{tpu_custom_call.1} parent=1 // pred_check_branch
      %1715 = sbr.rel (0) target = $region69
    $region68: #{tpu_custom_call.1} parent=1 // pred_region
      %1716 = dma.done [#allocation12], 128
    $region69: #{tpu_custom_call.1} parent=1 // pred_fallthru
      _
    %1717 = vsyncpa [#allocation5], 1
    %1718 = vsyncpa [#allocation8], 1
    %1719 = vsyncpa [#allocation6], 1
    %1720 = vsyncpa [#allocation12], 1

</llo_original>
